<compile_context>
chip_gen: v5e
topology: v5e:2x2
jax: 0.10.0
libtpu: 0.0.40
codegen_flags: <defaults>
</compile_context>

<pallas_src>
import math
from functools import partial

import jax
import jax.numpy as jnp
from jax.experimental import pallas as pl
from jax.experimental.pallas import tpu as pltpu

LANE = 128


def _round_up(n, m=LANE):
    return ((n + m - 1) // m) * m


def layer_dims(input_dim, latent_vector_size):
    """(in, out) for the 8 nn.Linear layers of Autoencoder (in forward order)."""
    return [
        (input_dim, 400), (400, 100), (100, 20),            # encoder
        (20, latent_vector_size),                            # latent_vector
        (latent_vector_size, 20), (20, 100), (100, 400),     # decoder
        (400, input_dim),                                     # decoder final
    ]


def init_params(key, input_dim, latent_vector_size):
    """PyTorch nn.Linear default init; weights stored pre-transposed (in, out)."""
    dims = layer_dims(input_dim, latent_vector_size)
    keys = jax.random.split(key, len(dims))
    params = []
    for k, (fi, fo) in zip(keys, dims):
        kw, kb = jax.random.split(k)
        bound = 1.0 / math.sqrt(fi)
        w = jax.random.uniform(kw, (fi, fo), jnp.float32, -bound, bound)
        b = jax.random.uniform(kb, (fo,), jnp.float32, -bound, bound)
        params.append((w, b))
    return params


def pack_params(params):
    """Pad feature dims to multiples of 128, cast weights to bf16, and pack
    them into one contiguous slab per distinct padded output width.  All biases
    (kept f32) go into a single (n_layers, max_out_pad) slab.

    Returns (w_slabs, bias_slab, layout) with
      layout[i] = (slab_index, row_offset, out_pad)   -- static Python ints.
    """
    n_layers = len(params)

    padded = []
    for (w, b) in params:
        fi, fo = w.shape
        fi_p, fo_p = _round_up(fi), _round_up(fo)
        w_p = jnp.zeros((fi_p, fo_p), jnp.float32).at[:fi, :fo].set(w)
        b_p = jnp.zeros((fo_p,), jnp.float32).at[:fo].set(b)
        padded.append((w_p, b_p))

    # Group layers by padded output width -> one weight slab per width
    # (no wasted column padding, few DMAs, all row offsets are 128-multiples).
    widths = sorted({w_p.shape[1] for w_p, _ in padded})
    slab_rows = {wd: [] for wd in widths}
    layout = [None] * n_layers
    for li, (w_p, _) in enumerate(padded):
        wd = w_p.shape[1]
        row_off = sum(blk.shape[0] for blk in slab_rows[wd])
        layout[li] = (widths.index(wd), row_off, wd)
        slab_rows[wd].append(w_p)

    w_slabs = tuple(
        jnp.concatenate(slab_rows[wd], axis=0).astype(jnp.bfloat16)
        for wd in widths
    )

    max_w = max(widths)
    bias_slab = jnp.zeros((max(8, n_layers), max_w), jnp.float32)
    for li, (_, b_p) in enumerate(padded):
        bias_slab = bias_slab.at[li, : b_p.shape[0]].set(b_p)

    return w_slabs, bias_slab, tuple(layout)


def _autoencoder_kernel(layout, d_out, *refs):
    """refs = (x_ref, *w_slab_refs, bias_ref, out_ref). `layout` is static."""
    x_ref = refs[0]
    out_ref = refs[-1]
    bias_ref = refs[-2]
    w_refs = refs[1:-2]
    n_layers = len(layout)

    h = x_ref[...].astype(jnp.float32)                 # (B, D_in) f32 activations
    for li, (slab_id, row_off, out_p) in enumerate(layout):
        k = h.shape[1]                                 # static contraction size
        w = w_refs[slab_id][row_off:row_off + k, :]    # (k, out_p) bf16 weights
        b = bias_ref[li:li + 1, :out_p]                # (1, out_p) f32 bias
        y = jnp.dot(h.astype(jnp.bfloat16), w,
                    preferred_element_type=jnp.float32) + b
        if li < n_layers - 1:
            h = jnp.maximum(y, 0.0)                    # ReLU (keeps zero padding)
        else:
            h = jax.nn.sigmoid(y)                      # final Sigmoid
    out_ref[...] = h[:, :d_out].astype(out_ref.dtype)


def autoencoder_forward(x, w_slabs, bias_slab, layout):
    B, d_in = x.shape
    d_out = d_in                                       # autoencoder output width
    vmem = pltpu.MemorySpace.VMEM
    n_inputs = 1 + len(w_slabs) + 1                    # x, weight slabs, biases
    return pl.pallas_call(
        partial(_autoencoder_kernel, layout, d_out),
        out_shape=jax.ShapeDtypeStruct((B, d_out), x.dtype),
        in_specs=[pl.BlockSpec(memory_space=vmem)] * n_inputs,
        out_specs=pl.BlockSpec(memory_space=vmem),
    )(x, *w_slabs, bias_slab)


def reference_forward(x, params):
    """Pure-JAX reference mimicking the kernel numerics (bf16 MXU, f32 acc)."""
    h = x
    n = len(params)
    for li, (w, b) in enumerate(params):
        y = jnp.dot(h.astype(jnp.bfloat16), w.astype(jnp.bfloat16),
                    preferred_element_type=jnp.float32) + b
        h = jnp.maximum(y, 0.0) if li < n - 1 else jax.nn.sigmoid(y)
    return h


if __name__ == "__main__":
    key = jax.random.PRNGKey(0)
    k_param, k_x = jax.random.split(key)

    batch = 8
    input_dim = 256            # input_shape[0]
    latent_vector_size = 8

    params = init_params(k_param, input_dim, latent_vector_size)
    w_slabs, bias_slab, layout = pack_params(params)

    x = jax.random.uniform(k_x, (batch, input_dim), jnp.float32)

    out = autoencoder_forward(x, w_slabs, bias_slab, layout)
    out = jax.block_until_ready(out)

    ref = reference_forward(x, params)
    assert out.shape == (batch, input_dim)
    assert jnp.allclose(out, ref, atol=1e-2, rtol=1e-2), "mismatch vs reference"

    print("KERNEL_OK")
</pallas_src>

<mosaic_0001>
module attributes {stable_mosaic.version = 11 : i64} {
  func.func @_autoencoder_kernel(%arg0: memref<8x256xf32, #tpu.memory_space<vmem>>, %arg1: memref<1024x128xbf16, #tpu.memory_space<vmem>>, %arg2: memref<512x256xbf16, #tpu.memory_space<vmem>>, %arg3: memref<384x512xbf16, #tpu.memory_space<vmem>>, %arg4: memref<8x512xf32, #tpu.memory_space<vmem>>, %arg5: memref<8x256xf32, #tpu.memory_space<vmem>>) attributes {dimension_semantics = [], scalar_prefetch = 0 : i64, scratch_operands = 0 : i64, tpu.core_type = #tpu.core_type<tc>} {
    %c0 = arith.constant 0 : index
    %c0_0 = arith.constant 0 : index
    %0 = vector.load %arg0[%c0, %c0_0] : memref<8x256xf32, #tpu.memory_space<vmem>>, vector<8x256xf32>
    %c0_1 = arith.constant 0 : index
    %c0_2 = arith.constant 0 : index
    %1 = vector.load %arg3[%c0_1, %c0_2] : memref<384x512xbf16, #tpu.memory_space<vmem>>, vector<256x512xbf16>
    %c0_3 = arith.constant 0 : index
    %c0_4 = arith.constant 0 : index
    %2 = vector.load %arg4[%c0_3, %c0_4] : memref<8x512xf32, #tpu.memory_space<vmem>>, vector<1x512xf32>
    %3 = arith.truncf %0 : vector<8x256xf32> to vector<8x256xbf16>
    %cst = arith.constant dense<0.000000e+00> : vector<8x512xf32>
    %4 = tpu.matmul %3, %1, %cst {dimension_numbers = #tpu.dot_dimension_numbers<[1], [0], [0], [1], [0, 0, 1, 1], [], []>} : vector<8x256xbf16>, vector<256x512xbf16>, vector<8x512xf32> -> vector<8x512xf32>
    %5 = vector.broadcast %2 : vector<1x512xf32> to vector<8x512xf32>
    %6 = arith.addf %4, %5 : vector<8x512xf32>
    %cst_5 = arith.constant 0.000000e+00 : f32
    %7 = vector.broadcast %cst_5 : f32 to vector<8x512xf32>
    %8 = arith.maximumf %6, %7 : vector<8x512xf32>
    %c0_6 = arith.constant 0 : index
    %c0_7 = arith.constant 0 : index
    %9 = vector.load %arg1[%c0_6, %c0_7] : memref<1024x128xbf16, #tpu.memory_space<vmem>>, vector<512x128xbf16>
    %c1 = arith.constant 1 : index
    %c0_8 = arith.constant 0 : index
    %10 = vector.load %arg4[%c1, %c0_8] : memref<8x512xf32, #tpu.memory_space<vmem>>, vector<1x128xf32>
    %11 = arith.truncf %8 : vector<8x512xf32> to vector<8x512xbf16>
    %cst_9 = arith.constant dense<0.000000e+00> : vector<8x128xf32>
    %12 = tpu.matmul %11, %9, %cst_9 {dimension_numbers = #tpu.dot_dimension_numbers<[1], [0], [0], [1], [0, 0, 1, 1], [], []>} : vector<8x512xbf16>, vector<512x128xbf16>, vector<8x128xf32> -> vector<8x128xf32>
    %13 = vector.broadcast %10 : vector<1x128xf32> to vector<8x128xf32>
    %14 = arith.addf %12, %13 : vector<8x128xf32>
    %cst_10 = arith.constant 0.000000e+00 : f32
    %15 = vector.broadcast %cst_10 : f32 to vector<8x128xf32>
    %16 = arith.maximumf %14, %15 : vector<8x128xf32>
    %c512 = arith.constant 512 : index
    %c0_11 = arith.constant 0 : index
    %17 = vector.load %arg1[%c512, %c0_11] : memref<1024x128xbf16, #tpu.memory_space<vmem>>, vector<128x128xbf16>
    %c2 = arith.constant 2 : index
    %c0_12 = arith.constant 0 : index
    %18 = vector.load %arg4[%c2, %c0_12] : memref<8x512xf32, #tpu.memory_space<vmem>>, vector<1x128xf32>
    %19 = arith.truncf %16 : vector<8x128xf32> to vector<8x128xbf16>
    %cst_13 = arith.constant dense<0.000000e+00> : vector<8x128xf32>
    %20 = tpu.matmul %19, %17, %cst_13 {dimension_numbers = #tpu.dot_dimension_numbers<[1], [0], [0], [1], [0, 0, 1, 1], [], []>} : vector<8x128xbf16>, vector<128x128xbf16>, vector<8x128xf32> -> vector<8x128xf32>
    %21 = vector.broadcast %18 : vector<1x128xf32> to vector<8x128xf32>
    %22 = arith.addf %20, %21 : vector<8x128xf32>
    %cst_14 = arith.constant 0.000000e+00 : f32
    %23 = vector.broadcast %cst_14 : f32 to vector<8x128xf32>
    %24 = arith.maximumf %22, %23 : vector<8x128xf32>
    %c640 = arith.constant 640 : index
    %c0_15 = arith.constant 0 : index
    %25 = vector.load %arg1[%c640, %c0_15] : memref<1024x128xbf16, #tpu.memory_space<vmem>>, vector<128x128xbf16>
    %c3 = arith.constant 3 : index
    %c0_16 = arith.constant 0 : index
    %26 = vector.load %arg4[%c3, %c0_16] : memref<8x512xf32, #tpu.memory_space<vmem>>, vector<1x128xf32>
    %27 = arith.truncf %24 : vector<8x128xf32> to vector<8x128xbf16>
    %cst_17 = arith.constant dense<0.000000e+00> : vector<8x128xf32>
    %28 = tpu.matmul %27, %25, %cst_17 {dimension_numbers = #tpu.dot_dimension_numbers<[1], [0], [0], [1], [0, 0, 1, 1], [], []>} : vector<8x128xbf16>, vector<128x128xbf16>, vector<8x128xf32> -> vector<8x128xf32>
    %29 = vector.broadcast %26 : vector<1x128xf32> to vector<8x128xf32>
    %30 = arith.addf %28, %29 : vector<8x128xf32>
    %cst_18 = arith.constant 0.000000e+00 : f32
    %31 = vector.broadcast %cst_18 : f32 to vector<8x128xf32>
    %32 = arith.maximumf %30, %31 : vector<8x128xf32>
    %c768 = arith.constant 768 : index
    %c0_19 = arith.constant 0 : index
    %33 = vector.load %arg1[%c768, %c0_19] : memref<1024x128xbf16, #tpu.memory_space<vmem>>, vector<128x128xbf16>
    %c4 = arith.constant 4 : index
    %c0_20 = arith.constant 0 : index
    %34 = vector.load %arg4[%c4, %c0_20] : memref<8x512xf32, #tpu.memory_space<vmem>>, vector<1x128xf32>
    %35 = arith.truncf %32 : vector<8x128xf32> to vector<8x128xbf16>
    %cst_21 = arith.constant dense<0.000000e+00> : vector<8x128xf32>
    %36 = tpu.matmul %35, %33, %cst_21 {dimension_numbers = #tpu.dot_dimension_numbers<[1], [0], [0], [1], [0, 0, 1, 1], [], []>} : vector<8x128xbf16>, vector<128x128xbf16>, vector<8x128xf32> -> vector<8x128xf32>
    %37 = vector.broadcast %34 : vector<1x128xf32> to vector<8x128xf32>
    %38 = arith.addf %36, %37 : vector<8x128xf32>
    %cst_22 = arith.constant 0.000000e+00 : f32
    %39 = vector.broadcast %cst_22 : f32 to vector<8x128xf32>
    %40 = arith.maximumf %38, %39 : vector<8x128xf32>
    %c896 = arith.constant 896 : index
    %c0_23 = arith.constant 0 : index
    %41 = vector.load %arg1[%c896, %c0_23] : memref<1024x128xbf16, #tpu.memory_space<vmem>>, vector<128x128xbf16>
    %c5 = arith.constant 5 : index
    %c0_24 = arith.constant 0 : index
    %42 = vector.load %arg4[%c5, %c0_24] : memref<8x512xf32, #tpu.memory_space<vmem>>, vector<1x128xf32>
    %43 = arith.truncf %40 : vector<8x128xf32> to vector<8x128xbf16>
    %cst_25 = arith.constant dense<0.000000e+00> : vector<8x128xf32>
    %44 = tpu.matmul %43, %41, %cst_25 {dimension_numbers = #tpu.dot_dimension_numbers<[1], [0], [0], [1], [0, 0, 1, 1], [], []>} : vector<8x128xbf16>, vector<128x128xbf16>, vector<8x128xf32> -> vector<8x128xf32>
    %45 = vector.broadcast %42 : vector<1x128xf32> to vector<8x128xf32>
    %46 = arith.addf %44, %45 : vector<8x128xf32>
    %cst_26 = arith.constant 0.000000e+00 : f32
    %47 = vector.broadcast %cst_26 : f32 to vector<8x128xf32>
    %48 = arith.maximumf %46, %47 : vector<8x128xf32>
    %c256 = arith.constant 256 : index
    %c0_27 = arith.constant 0 : index
    %49 = vector.load %arg3[%c256, %c0_27] : memref<384x512xbf16, #tpu.memory_space<vmem>>, vector<128x512xbf16>
    %c6 = arith.constant 6 : index
    %c0_28 = arith.constant 0 : index
    %50 = vector.load %arg4[%c6, %c0_28] : memref<8x512xf32, #tpu.memory_space<vmem>>, vector<1x512xf32>
    %51 = arith.truncf %48 : vector<8x128xf32> to vector<8x128xbf16>
    %cst_29 = arith.constant dense<0.000000e+00> : vector<8x512xf32>
    %52 = tpu.matmul %51, %49, %cst_29 {dimension_numbers = #tpu.dot_dimension_numbers<[1], [0], [0], [1], [0, 0, 1, 1], [], []>} : vector<8x128xbf16>, vector<128x512xbf16>, vector<8x512xf32> -> vector<8x512xf32>
    %53 = vector.broadcast %50 : vector<1x512xf32> to vector<8x512xf32>
    %54 = arith.addf %52, %53 : vector<8x512xf32>
    %cst_30 = arith.constant 0.000000e+00 : f32
    %55 = vector.broadcast %cst_30 : f32 to vector<8x512xf32>
    %56 = arith.maximumf %54, %55 : vector<8x512xf32>
    %c0_31 = arith.constant 0 : index
    %c0_32 = arith.constant 0 : index
    %57 = vector.load %arg2[%c0_31, %c0_32] : memref<512x256xbf16, #tpu.memory_space<vmem>>, vector<512x256xbf16>
    %c7 = arith.constant 7 : index
    %c0_33 = arith.constant 0 : index
    %58 = vector.load %arg4[%c7, %c0_33] : memref<8x512xf32, #tpu.memory_space<vmem>>, vector<1x256xf32>
    %59 = arith.truncf %56 : vector<8x512xf32> to vector<8x512xbf16>
    %cst_34 = arith.constant dense<0.000000e+00> : vector<8x256xf32>
    %60 = tpu.matmul %59, %57, %cst_34 {dimension_numbers = #tpu.dot_dimension_numbers<[1], [0], [0], [1], [0, 0, 1, 1], [], []>} : vector<8x512xbf16>, vector<512x256xbf16>, vector<8x256xf32> -> vector<8x256xf32>
    %61 = vector.broadcast %58 : vector<1x256xf32> to vector<8x256xf32>
    %62 = arith.addf %60, %61 : vector<8x256xf32>
    %63 = arith.negf %62 : vector<8x256xf32>
    %64 = math.exp %63 : vector<8x256xf32>
    %cst_35 = arith.constant 1.000000e+00 : f32
    %65 = vector.broadcast %cst_35 : f32 to vector<8x256xf32>
    %66 = arith.addf %65, %64 : vector<8x256xf32>
    %67 = arith.divf %65, %66 : vector<8x256xf32>
    %c0_36 = arith.constant 0 : index
    %c0_37 = arith.constant 0 : index
    %68 = vector.load %arg5[%c0_36, %c0_37] : memref<8x256xf32, #tpu.memory_space<vmem>>, vector<8x256xf32>
    tpu.vector_store %arg5[%c0_36, %c0_37], %67 {strides = array<i32>} : memref<8x256xf32, #tpu.memory_space<vmem>>, vector<8x256xf32>,
    return
  }
}

</mosaic_0001>

<llo_original>
// kernel: tpu_custom_call.1
$region0: #{tpu_custom_call.1}
  #allocation0 [shape = 'u32[]', space=smem, size = 0x4, offset = 0x4, fixed_abs, tag = 'smem constant byte address 0x4 - core index']
  #allocation1 [shape = 'u32[72,128]{1,0:T(1,128)}', space=vmem, size = 0x9000, scoped, tag = 'internal scratch']
  %s0 = inlined_call_operand.hbm [shape: f32[8,256], index: 0, kind: input, shape index: {}]
  %s1 = inlined_call_operand.hbm [shape: bf16[1024,128], index: 1, kind: input, shape index: {}]
  %s2 = inlined_call_operand.hbm [shape: bf16[512,256], index: 2, kind: input, shape index: {}]
  %s3 = inlined_call_operand.hbm [shape: bf16[384,512], index: 3, kind: input, shape index: {}]
  %s4 = inlined_call_operand.hbm [shape: f32[8,512], index: 4, kind: input, shape index: {}]
  %s5 = inlined_call_operand.hbm [shape: f32[8,256], index: 5, kind: output, shape index: {}]
  %s6 = sld [smem:[#allocation0]]
  $region50: #{tpu_custom_call.1} parent=0
    _
  %s8 = ssub.s32 1, %s6
  %s9 = scalar_select 0, %s8, %s6
  $region1: #{tpu_custom_call.1} parent=0
    #allocation2 [shape = 'u8[8192]{0}', space=vmem, size = 0x2000, scoped, tag = 'input window, operand 0, single buffered']
    #allocation3 [shape = 's32[1]{0}', space=sflag, size = 0x4, scoped, tag = 'scoped memory for tpu_custom_call.1']
    #allocation4 [shape = 's32[1]{0}', space=sflag, size = 0x4, scoped, tag = 'scoped memory for tpu_custom_call.1']
    #allocation5 [shape = 'u8[262144]{0}', space=vmem, size = 0x40000, scoped, tag = 'input window, operand 1, single buffered']
    #allocation6 [shape = 's32[1]{0}', space=sflag, size = 0x4, scoped, tag = 'scoped memory for tpu_custom_call.1']
    #allocation7 [shape = 'u8[262144]{0}', space=vmem, size = 0x40000, scoped, tag = 'input window, operand 2, single buffered']
    #allocation8 [shape = 'u8[393216]{0}', space=vmem, size = 0x60000, scoped, tag = 'input window, operand 3, single buffered']
    #allocation9 [shape = 's32[1]{0}', space=sflag, size = 0x4, scoped, tag = 'scoped memory for tpu_custom_call.1']
    #allocation10 [shape = 'u8[16384]{0}', space=vmem, size = 0x4000, scoped, tag = 'input window, operand 4, single buffered']
    #allocation11 [shape = 'u8[8192]{0}', space=vmem, size = 0x2000, scoped, tag = 'output window, operand 0, single buffered']
    %10 = vsyncpa [#allocation3], 0
    %11 = vsyncpa [#allocation6], 0
    %12 = vsyncpa [#allocation9], 0
    %13 = vsyncpa [#allocation4], 0
    // Predicated region
    $region2: #{tpu_custom_call.1} parent=1 // pred_check
      _
    $region3: #{tpu_custom_call.1} parent=1 // pred_check_branch
      %15 = sbr.rel (0) target = $region5
    $region4: #{tpu_custom_call.1} parent=1 // pred_region
      %17 = vsyncadd [#allocation3], 0
      %s19 = sshll.u32 %s0, 4
      %s20 = int_to_ptr.hbm [resolvable:$true] %s19
      %s21 = sshll.u32 [#allocation2], 4
      %s22 = int_to_ptr.vmem [resolvable:$true] %s21
      %24 = dma.hbm_to_vmem [thread:$0]  %s20, 256, %s22, [#allocation3]
    $region5: #{tpu_custom_call.1} parent=1 // pred_fallthru
      _
    // Predicated region
    $region6: #{tpu_custom_call.1} parent=1 // pred_check
      _
    $region7: #{tpu_custom_call.1} parent=1 // pred_check_branch
      %26 = sbr.rel (0) target = $region9
    $region8: #{tpu_custom_call.1} parent=1 // pred_region
      %28 = vsyncadd [#allocation6], 0
      %s29 = sshll.u32 %s1, 4
      %s30 = int_to_ptr.hbm [resolvable:$true] %s29
      %s31 = sshll.u32 [#allocation5], 4
      %s32 = int_to_ptr.vmem [resolvable:$true] %s31
      %37 = dma.hbm_to_vmem [thread:$0]  %s30, 8192, %s32, [#allocation6], 64, 64, 4
    $region9: #{tpu_custom_call.1} parent=1 // pred_fallthru
      _
    // Predicated region
    $region10: #{tpu_custom_call.1} parent=1 // pred_check
      _
    $region11: #{tpu_custom_call.1} parent=1 // pred_check_branch
      %39 = sbr.rel (0) target = $region13
    $region12: #{tpu_custom_call.1} parent=1 // pred_region
      %41 = vsyncadd [#allocation6], 0
      %s42 = sshll.u32 %s2, 4
      %s43 = int_to_ptr.hbm [resolvable:$true] %s42
      %s44 = sshll.u32 [#allocation7], 4
      %s45 = int_to_ptr.vmem [resolvable:$true] %s44
      %50 = dma.hbm_to_vmem [thread:$0]  %s43, 8192, %s45, [#allocation6], 128, 128, 8
    $region13: #{tpu_custom_call.1} parent=1 // pred_fallthru
      _
    // Predicated region
    $region14: #{tpu_custom_call.1} parent=1 // pred_check
      _
    $region15: #{tpu_custom_call.1} parent=1 // pred_check_branch
      %52 = sbr.rel (0) target = $region17
    $region16: #{tpu_custom_call.1} parent=1 // pred_region
      %54 = vsyncadd [#allocation9], 0
      %s55 = sshll.u32 %s3, 4
      %s56 = int_to_ptr.hbm [resolvable:$true] %s55
      %s57 = sshll.u32 [#allocation8], 4
      %s58 = int_to_ptr.vmem [resolvable:$true] %s57
      %63 = dma.hbm_to_vmem [thread:$0]  %s56, 12288, %s58, [#allocation9], 256, 256, 16
    $region17: #{tpu_custom_call.1} parent=1 // pred_fallthru
      _
    // Predicated region
    $region18: #{tpu_custom_call.1} parent=1 // pred_check
      _
    $region19: #{tpu_custom_call.1} parent=1 // pred_check_branch
      %65 = sbr.rel (0) target = $region21
    $region20: #{tpu_custom_call.1} parent=1 // pred_region
      %67 = vsyncadd [#allocation9], 0
      %s69 = sshll.u32 %s4, 4
      %s70 = int_to_ptr.hbm [resolvable:$true] %s69
      %s71 = sshll.u32 [#allocation10], 4
      %s72 = int_to_ptr.vmem [resolvable:$true] %s71
      %74 = dma.hbm_to_vmem [thread:$0]  %s70, 512, %s72, [#allocation9]
    $region21: #{tpu_custom_call.1} parent=1 // pred_fallthru
      _
    // Predicated region
    $region22: #{tpu_custom_call.1} parent=1 // pred_check
      _
    $region23: #{tpu_custom_call.1} parent=1 // pred_check_branch
      %76 = sbr.rel (0) target = $region25
    $region24: #{tpu_custom_call.1} parent=1 // pred_region
      %78 = dma.done [#allocation3], 256
    $region25: #{tpu_custom_call.1} parent=1 // pred_fallthru
      _
    // Predicated region
    $region26: #{tpu_custom_call.1} parent=1 // pred_check
      _
    $region27: #{tpu_custom_call.1} parent=1 // pred_check_branch
      %80 = sbr.rel (0) target = $region29
    $region28: #{tpu_custom_call.1} parent=1 // pred_region
      %82 = dma.done [#allocation6], 8192
    $region29: #{tpu_custom_call.1} parent=1 // pred_fallthru
      _
    // Predicated region
    $region30: #{tpu_custom_call.1} parent=1 // pred_check
      _
    $region31: #{tpu_custom_call.1} parent=1 // pred_check_branch
      %84 = sbr.rel (0) target = $region33
    $region32: #{tpu_custom_call.1} parent=1 // pred_region
      %86 = dma.done [#allocation6], 8192
    $region33: #{tpu_custom_call.1} parent=1 // pred_fallthru
      _
    // Predicated region
    $region34: #{tpu_custom_call.1} parent=1 // pred_check
      _
    $region35: #{tpu_custom_call.1} parent=1 // pred_check_branch
      %88 = sbr.rel (0) target = $region37
    $region36: #{tpu_custom_call.1} parent=1 // pred_region
      %90 = dma.done [#allocation9], 12288
    $region37: #{tpu_custom_call.1} parent=1 // pred_fallthru
      _
    // Predicated region
    $region38: #{tpu_custom_call.1} parent=1 // pred_check
      _
    $region39: #{tpu_custom_call.1} parent=1 // pred_check_branch
      %92 = sbr.rel (0) target = $region41
    $region40: #{tpu_custom_call.1} parent=1 // pred_region
      %94 = dma.done [#allocation9], 512
    $region41: #{tpu_custom_call.1} parent=1 // pred_fallthru
      _
    %v95 = vld [vmem:[#allocation2] sm:$0xff]
    %v96 = vld [vmem:[#allocation2 + $0x8] sm:$0xff]
    %v97 = vld [vmem:[#allocation8] sm:$0xff]
    %v98 = vld [vmem:[#allocation8 + $0x8] sm:$0xff]
    %v99 = vld [vmem:[#allocation8 + $0x10] sm:$0xff]
    %v100 = vld [vmem:[#allocation8 + $0x18] sm:$0xff]
    %v101 = vld [vmem:[#allocation8 + $0x20] sm:$0xff]
    %v102 = vld [vmem:[#allocation8 + $0x28] sm:$0xff]
    %v103 = vld [vmem:[#allocation8 + $0x30] sm:$0xff]
    %v104 = vld [vmem:[#allocation8 + $0x38] sm:$0xff]
    %v105 = vld [vmem:[#allocation8 + $0x40] sm:$0xff]
    %v106 = vld [vmem:[#allocation8 + $0x48] sm:$0xff]
    %v107 = vld [vmem:[#allocation8 + $0x50] sm:$0xff]
    %v108 = vld [vmem:[#allocation8 + $0x58] sm:$0xff]
    %v109 = vld [vmem:[#allocation8 + $0x60] sm:$0xff]
    %v110 = vld [vmem:[#allocation8 + $0x68] sm:$0xff]
    %v111 = vld [vmem:[#allocation8 + $0x70] sm:$0xff]
    %v112 = vld [vmem:[#allocation8 + $0x78] sm:$0xff]
    %v113 = vld [vmem:[#allocation8 + $0x80] sm:$0xff]
    %v114 = vld [vmem:[#allocation8 + $0x88] sm:$0xff]
    %v115 = vld [vmem:[#allocation8 + $0x90] sm:$0xff]
    %v116 = vld [vmem:[#allocation8 + $0x98] sm:$0xff]
    %v117 = vld [vmem:[#allocation8 + $0xa0] sm:$0xff]
    %v118 = vld [vmem:[#allocation8 + $0xa8] sm:$0xff]
    %v119 = vld [vmem:[#allocation8 + $0xb0] sm:$0xff]
    %v120 = vld [vmem:[#allocation8 + $0xb8] sm:$0xff]
    %v121 = vld [vmem:[#allocation8 + $0xc0] sm:$0xff]
    %v122 = vld [vmem:[#allocation8 + $0xc8] sm:$0xff]
    %v123 = vld [vmem:[#allocation8 + $0xd0] sm:$0xff]
    %v124 = vld [vmem:[#allocation8 + $0xd8] sm:$0xff]
    %v125 = vld [vmem:[#allocation8 + $0xe0] sm:$0xff]
    %v126 = vld [vmem:[#allocation8 + $0xe8] sm:$0xff]
    %v127 = vld [vmem:[#allocation8 + $0xf0] sm:$0xff]
    %v128 = vld [vmem:[#allocation8 + $0xf8] sm:$0xff]
    %v129 = vld [vmem:[#allocation8 + $0x100] sm:$0xff]
    %v130 = vld [vmem:[#allocation8 + $0x108] sm:$0xff]
    %v131 = vld [vmem:[#allocation8 + $0x110] sm:$0xff]
    %v132 = vld [vmem:[#allocation8 + $0x118] sm:$0xff]
    %v133 = vld [vmem:[#allocation8 + $0x120] sm:$0xff]
    %v134 = vld [vmem:[#allocation8 + $0x128] sm:$0xff]
    %v135 = vld [vmem:[#allocation8 + $0x130] sm:$0xff]
    %v136 = vld [vmem:[#allocation8 + $0x138] sm:$0xff]
    %v137 = vld [vmem:[#allocation8 + $0x140] sm:$0xff]
    %v138 = vld [vmem:[#allocation8 + $0x148] sm:$0xff]
    %v139 = vld [vmem:[#allocation8 + $0x150] sm:$0xff]
    %v140 = vld [vmem:[#allocation8 + $0x158] sm:$0xff]
    %v141 = vld [vmem:[#allocation8 + $0x160] sm:$0xff]
    %v142 = vld [vmem:[#allocation8 + $0x168] sm:$0xff]
    %v143 = vld [vmem:[#allocation8 + $0x170] sm:$0xff]
    %v144 = vld [vmem:[#allocation8 + $0x178] sm:$0xff]
    %v145 = vld [vmem:[#allocation8 + $0x180] sm:$0xff]
    %v146 = vld [vmem:[#allocation8 + $0x188] sm:$0xff]
    %v147 = vld [vmem:[#allocation8 + $0x190] sm:$0xff]
    %v148 = vld [vmem:[#allocation8 + $0x198] sm:$0xff]
    %v149 = vld [vmem:[#allocation8 + $0x1a0] sm:$0xff]
    %v150 = vld [vmem:[#allocation8 + $0x1a8] sm:$0xff]
    %v151 = vld [vmem:[#allocation8 + $0x1b0] sm:$0xff]
    %v152 = vld [vmem:[#allocation8 + $0x1b8] sm:$0xff]
    %v153 = vld [vmem:[#allocation8 + $0x1c0] sm:$0xff]
    %v154 = vld [vmem:[#allocation8 + $0x1c8] sm:$0xff]
    %v155 = vld [vmem:[#allocation8 + $0x1d0] sm:$0xff]
    %v156 = vld [vmem:[#allocation8 + $0x1d8] sm:$0xff]
    %v157 = vld [vmem:[#allocation8 + $0x1e0] sm:$0xff]
    %v158 = vld [vmem:[#allocation8 + $0x1e8] sm:$0xff]
    %v159 = vld [vmem:[#allocation8 + $0x1f0] sm:$0xff]
    %v160 = vld [vmem:[#allocation8 + $0x1f8] sm:$0xff]
    %v161 = vld [vmem:[#allocation10] ss:$8 sm:$0xf]
    %v162 = vpack.c.bf16 %v95, %v95
    %v163 = vpack.c.bf16 %v96, %v96
    %v165 = vperm.slane %v161, 0
    %v166 = vperm.slane %v161, 1
    %v167 = vperm.slane %v161, 2
    %v168 = vperm.slane %v161, 3
    %v237 = vunpack.c.l.b16 %v97
    %v238 = vunpack.c.h.b16 %v97
    %v239 = vunpack.c.l.b16 %v98
    %v240 = vunpack.c.h.b16 %v98
    %v241 = vunpack.c.l.b16 %v99
    %v242 = vunpack.c.h.b16 %v99
    %v243 = vunpack.c.l.b16 %v100
    %v244 = vunpack.c.h.b16 %v100
    %v245 = vunpack.c.l.b16 %v101
    %v246 = vunpack.c.h.b16 %v101
    %v247 = vunpack.c.l.b16 %v102
    %v248 = vunpack.c.h.b16 %v102
    %v249 = vunpack.c.l.b16 %v103
    %v250 = vunpack.c.h.b16 %v103
    %v251 = vunpack.c.l.b16 %v104
    %v252 = vunpack.c.h.b16 %v104
    %v253 = vunpack.c.l.b16 %v105
    %v254 = vunpack.c.h.b16 %v105
    %v255 = vunpack.c.l.b16 %v106
    %v256 = vunpack.c.h.b16 %v106
    %v257 = vunpack.c.l.b16 %v107
    %v258 = vunpack.c.h.b16 %v107
    %v259 = vunpack.c.l.b16 %v108
    %v260 = vunpack.c.h.b16 %v108
    %v261 = vunpack.c.l.b16 %v109
    %v262 = vunpack.c.h.b16 %v109
    %v263 = vunpack.c.l.b16 %v110
    %v264 = vunpack.c.h.b16 %v110
    %v265 = vunpack.c.l.b16 %v111
    %v266 = vunpack.c.h.b16 %v111
    %v267 = vunpack.c.l.b16 %v112
    %v268 = vunpack.c.h.b16 %v112
    %v269 = vunpack.c.l.b16 %v113
    %v270 = vunpack.c.h.b16 %v113
    %v271 = vunpack.c.l.b16 %v114
    %v272 = vunpack.c.h.b16 %v114
    %v273 = vunpack.c.l.b16 %v115
    %v274 = vunpack.c.h.b16 %v115
    %v275 = vunpack.c.l.b16 %v116
    %v276 = vunpack.c.h.b16 %v116
    %v277 = vunpack.c.l.b16 %v117
    %v278 = vunpack.c.h.b16 %v117
    %v279 = vunpack.c.l.b16 %v118
    %v280 = vunpack.c.h.b16 %v118
    %v281 = vunpack.c.l.b16 %v119
    %v282 = vunpack.c.h.b16 %v119
    %v283 = vunpack.c.l.b16 %v120
    %v284 = vunpack.c.h.b16 %v120
    %v285 = vunpack.c.l.b16 %v121
    %v286 = vunpack.c.h.b16 %v121
    %v287 = vunpack.c.l.b16 %v122
    %v288 = vunpack.c.h.b16 %v122
    %v289 = vunpack.c.l.b16 %v123
    %v290 = vunpack.c.h.b16 %v123
    %v291 = vunpack.c.l.b16 %v124
    %v292 = vunpack.c.h.b16 %v124
    %v293 = vunpack.c.l.b16 %v125
    %v294 = vunpack.c.h.b16 %v125
    %v295 = vunpack.c.l.b16 %v126
    %v296 = vunpack.c.h.b16 %v126
    %v297 = vunpack.c.l.b16 %v127
    %v298 = vunpack.c.h.b16 %v127
    %v299 = vunpack.c.l.b16 %v128
    %v300 = vunpack.c.h.b16 %v128
    %v301 = vunpack.c.l.b16 %v129
    %v302 = vunpack.c.h.b16 %v129
    %v303 = vunpack.c.l.b16 %v130
    %v304 = vunpack.c.h.b16 %v130
    %v305 = vunpack.c.l.b16 %v131
    %v306 = vunpack.c.h.b16 %v131
    %v307 = vunpack.c.l.b16 %v132
    %v308 = vunpack.c.h.b16 %v132
    %v309 = vunpack.c.l.b16 %v133
    %v310 = vunpack.c.h.b16 %v133
    %v311 = vunpack.c.l.b16 %v134
    %v312 = vunpack.c.h.b16 %v134
    %v313 = vunpack.c.l.b16 %v135
    %v314 = vunpack.c.h.b16 %v135
    %v315 = vunpack.c.l.b16 %v136
    %v316 = vunpack.c.h.b16 %v136
    %v317 = vunpack.c.l.b16 %v137
    %v318 = vunpack.c.h.b16 %v137
    %v319 = vunpack.c.l.b16 %v138
    %v320 = vunpack.c.h.b16 %v138
    %v321 = vunpack.c.l.b16 %v139
    %v322 = vunpack.c.h.b16 %v139
    %v323 = vunpack.c.l.b16 %v140
    %v324 = vunpack.c.h.b16 %v140
    %v325 = vunpack.c.l.b16 %v141
    %v326 = vunpack.c.h.b16 %v141
    %v327 = vunpack.c.l.b16 %v142
    %v328 = vunpack.c.h.b16 %v142
    %v329 = vunpack.c.l.b16 %v143
    %v330 = vunpack.c.h.b16 %v143
    %v331 = vunpack.c.l.b16 %v144
    %v332 = vunpack.c.h.b16 %v144
    %v333 = vunpack.c.l.b16 %v145
    %v334 = vunpack.c.h.b16 %v145
    %v335 = vunpack.c.l.b16 %v146
    %v336 = vunpack.c.h.b16 %v146
    %v337 = vunpack.c.l.b16 %v147
    %v338 = vunpack.c.h.b16 %v147
    %v339 = vunpack.c.l.b16 %v148
    %v340 = vunpack.c.h.b16 %v148
    %v341 = vunpack.c.l.b16 %v149
    %v342 = vunpack.c.h.b16 %v149
    %v343 = vunpack.c.l.b16 %v150
    %v344 = vunpack.c.h.b16 %v150
    %v345 = vunpack.c.l.b16 %v151
    %v346 = vunpack.c.h.b16 %v151
    %v347 = vunpack.c.l.b16 %v152
    %v348 = vunpack.c.h.b16 %v152
    %v349 = vunpack.c.l.b16 %v153
    %v350 = vunpack.c.h.b16 %v153
    %v351 = vunpack.c.l.b16 %v154
    %v352 = vunpack.c.h.b16 %v154
    %v353 = vunpack.c.l.b16 %v155
    %v354 = vunpack.c.h.b16 %v155
    %v355 = vunpack.c.l.b16 %v156
    %v356 = vunpack.c.h.b16 %v156
    %v357 = vunpack.c.l.b16 %v157
    %v358 = vunpack.c.h.b16 %v157
    %v359 = vunpack.c.l.b16 %v158
    %v360 = vunpack.c.h.b16 %v158
    %v361 = vunpack.c.l.b16 %v159
    %v362 = vunpack.c.h.b16 %v159
    %v363 = vunpack.c.l.b16 %v160
    %v364 = vunpack.c.h.b16 %v160
    %v365 = vpack.c.b16 %v241, %v237
    %v366 = vpack.c.b16 %v242, %v238
    %v367 = vpack.c.b16 %v243, %v239
    %v368 = vpack.c.b16 %v244, %v240
    %v369 = vpack.c.b16 %v249, %v245
    %v370 = vpack.c.b16 %v250, %v246
    %v371 = vpack.c.b16 %v251, %v247
    %v372 = vpack.c.b16 %v252, %v248
    %v373 = vpack.c.b16 %v257, %v253
    %v374 = vpack.c.b16 %v258, %v254
    %v375 = vpack.c.b16 %v259, %v255
    %v376 = vpack.c.b16 %v260, %v256
    %v377 = vpack.c.b16 %v265, %v261
    %v378 = vpack.c.b16 %v266, %v262
    %v379 = vpack.c.b16 %v267, %v263
    %v380 = vpack.c.b16 %v268, %v264
    %v381 = vpack.c.b16 %v273, %v269
    %v382 = vpack.c.b16 %v274, %v270
    %v383 = vpack.c.b16 %v275, %v271
    %v384 = vpack.c.b16 %v276, %v272
    %v385 = vpack.c.b16 %v281, %v277
    %v386 = vpack.c.b16 %v282, %v278
    %v387 = vpack.c.b16 %v283, %v279
    %v388 = vpack.c.b16 %v284, %v280
    %v389 = vpack.c.b16 %v289, %v285
    %v390 = vpack.c.b16 %v290, %v286
    %v391 = vpack.c.b16 %v291, %v287
    %v392 = vpack.c.b16 %v292, %v288
    %v393 = vpack.c.b16 %v297, %v293
    %v394 = vpack.c.b16 %v298, %v294
    %v395 = vpack.c.b16 %v299, %v295
    %v396 = vpack.c.b16 %v300, %v296
    %v397 = vpack.c.b16 %v305, %v301
    %v398 = vpack.c.b16 %v306, %v302
    %v399 = vpack.c.b16 %v307, %v303
    %v400 = vpack.c.b16 %v308, %v304
    %v401 = vpack.c.b16 %v313, %v309
    %v402 = vpack.c.b16 %v314, %v310
    %v403 = vpack.c.b16 %v315, %v311
    %v404 = vpack.c.b16 %v316, %v312
    %v405 = vpack.c.b16 %v321, %v317
    %v406 = vpack.c.b16 %v322, %v318
    %v407 = vpack.c.b16 %v323, %v319
    %v408 = vpack.c.b16 %v324, %v320
    %v409 = vpack.c.b16 %v329, %v325
    %v410 = vpack.c.b16 %v330, %v326
    %v411 = vpack.c.b16 %v331, %v327
    %v412 = vpack.c.b16 %v332, %v328
    %v413 = vpack.c.b16 %v337, %v333
    %v414 = vpack.c.b16 %v338, %v334
    %v415 = vpack.c.b16 %v339, %v335
    %v416 = vpack.c.b16 %v340, %v336
    %v417 = vpack.c.b16 %v345, %v341
    %v418 = vpack.c.b16 %v346, %v342
    %v419 = vpack.c.b16 %v347, %v343
    %v420 = vpack.c.b16 %v348, %v344
    %v421 = vpack.c.b16 %v353, %v349
    %v422 = vpack.c.b16 %v354, %v350
    %v423 = vpack.c.b16 %v355, %v351
    %v424 = vpack.c.b16 %v356, %v352
    %v425 = vpack.c.b16 %v361, %v357
    %v426 = vpack.c.b16 %v362, %v358
    %v427 = vpack.c.b16 %v363, %v359
    %v428 = vpack.c.b16 %v364, %v360
    %493 = vmatpush.bf16.msra.mxu0 %v393
    %494 = vmatpush.bf16.msra.mxu0 %v389
    %495 = vmatpush.bf16.msra.mxu0 %v385
    %496 = vmatpush.bf16.msra.mxu0 %v381
    %497 = vmatpush.bf16.msra.mxu0 %v377
    %498 = vmatpush.bf16.msra.mxu0 %v373
    %499 = vmatpush.bf16.msra.mxu0 %v369
    %500 = vmatpush.bf16.msra.mxu0 %v365
    %501 = vmatmul.bf16.gmra.mxu0 %v162
    %v502 = vpop.f32.mrf.mxu0
    %v503 = vadd.f32 %v165, %v502
    %v504 = vpop.f32.mrf.mxu0
    %505 = vdwg.mxu0
    %506 = vmatpush.bf16.msra.mxu0 %v425
    %507 = vmatpush.bf16.msra.mxu0 %v421
    %508 = vmatpush.bf16.msra.mxu0 %v417
    %509 = vmatpush.bf16.msra.mxu0 %v413
    %510 = vmatpush.bf16.msra.mxu0 %v409
    %511 = vmatpush.bf16.msra.mxu0 %v405
    %512 = vmatpush.bf16.msra.mxu0 %v401
    %513 = vmatpush.bf16.msra.mxu0 %v397
    %514 = vmatmul.bf16.gmra.mxu0 %v163
    %v515 = vpop.f32.mrf.mxu0
    %v516 = vadd.f32 %v503, %v515
    %v517 = vpop.f32.mrf.mxu0
    %518 = vdwg.mxu0
    %519 = vmatpush.bf16.msra.mxu0 %v394
    %520 = vmatpush.bf16.msra.mxu0 %v390
    %521 = vmatpush.bf16.msra.mxu0 %v386
    %522 = vmatpush.bf16.msra.mxu0 %v382
    %523 = vmatpush.bf16.msra.mxu0 %v378
    %524 = vmatpush.bf16.msra.mxu0 %v374
    %525 = vmatpush.bf16.msra.mxu0 %v370
    %526 = vmatpush.bf16.msra.mxu0 %v366
    %527 = vmatmul.bf16.gmra.mxu0 %v162
    %v528 = vpop.f32.mrf.mxu0
    %v529 = vadd.f32 %v166, %v528
    %v530 = vpop.f32.mrf.mxu0
    %531 = vdwg.mxu0
    %532 = vmatpush.bf16.msra.mxu0 %v426
    %533 = vmatpush.bf16.msra.mxu0 %v422
    %534 = vmatpush.bf16.msra.mxu0 %v418
    %535 = vmatpush.bf16.msra.mxu0 %v414
    %536 = vmatpush.bf16.msra.mxu0 %v410
    %537 = vmatpush.bf16.msra.mxu0 %v406
    %538 = vmatpush.bf16.msra.mxu0 %v402
    %539 = vmatpush.bf16.msra.mxu0 %v398
    %540 = vmatmul.bf16.gmra.mxu0 %v163
    %v541 = vpop.f32.mrf.mxu0
    %v542 = vadd.f32 %v529, %v541
    %v543 = vpop.f32.mrf.mxu0
    %544 = vdwg.mxu0
    %545 = vmatpush.bf16.msra.mxu0 %v395
    %546 = vmatpush.bf16.msra.mxu0 %v391
    %547 = vmatpush.bf16.msra.mxu0 %v387
    %548 = vmatpush.bf16.msra.mxu0 %v383
    %549 = vmatpush.bf16.msra.mxu0 %v379
    %550 = vmatpush.bf16.msra.mxu0 %v375
    %551 = vmatpush.bf16.msra.mxu0 %v371
    %552 = vmatpush.bf16.msra.mxu0 %v367
    %553 = vmatmul.bf16.gmra.mxu0 %v162
    %v554 = vpop.f32.mrf.mxu0
    %v555 = vadd.f32 %v167, %v554
    %v556 = vpop.f32.mrf.mxu0
    %557 = vdwg.mxu0
    %558 = vmatpush.bf16.msra.mxu0 %v427
    %559 = vmatpush.bf16.msra.mxu0 %v423
    %560 = vmatpush.bf16.msra.mxu0 %v419
    %561 = vmatpush.bf16.msra.mxu0 %v415
    %562 = vmatpush.bf16.msra.mxu0 %v411
    %563 = vmatpush.bf16.msra.mxu0 %v407
    %564 = vmatpush.bf16.msra.mxu0 %v403
    %565 = vmatpush.bf16.msra.mxu0 %v399
    %566 = vmatmul.bf16.gmra.mxu0 %v163
    %v567 = vpop.f32.mrf.mxu0
    %v568 = vadd.f32 %v555, %v567
    %v569 = vpop.f32.mrf.mxu0
    %570 = vdwg.mxu0
    %571 = vmatpush.bf16.msra.mxu0 %v396
    %572 = vmatpush.bf16.msra.mxu0 %v392
    %573 = vmatpush.bf16.msra.mxu0 %v388
    %574 = vmatpush.bf16.msra.mxu0 %v384
    %575 = vmatpush.bf16.msra.mxu0 %v380
    %576 = vmatpush.bf16.msra.mxu0 %v376
    %577 = vmatpush.bf16.msra.mxu0 %v372
    %578 = vmatpush.bf16.msra.mxu0 %v368
    %579 = vmatmul.bf16.gmra.mxu0 %v162
    %v580 = vpop.f32.mrf.mxu0
    %v581 = vadd.f32 %v168, %v580
    %v582 = vpop.f32.mrf.mxu0
    %583 = vdwg.mxu0
    %584 = vmatpush.bf16.msra.mxu0 %v428
    %585 = vmatpush.bf16.msra.mxu0 %v424
    %586 = vmatpush.bf16.msra.mxu0 %v420
    %587 = vmatpush.bf16.msra.mxu0 %v416
    %588 = vmatpush.bf16.msra.mxu0 %v412
    %589 = vmatpush.bf16.msra.mxu0 %v408
    %590 = vmatpush.bf16.msra.mxu0 %v404
    %591 = vmatpush.bf16.msra.mxu0 %v400
    %592 = vmatmul.bf16.gmra.mxu0 %v163
    %v593 = vpop.f32.mrf.mxu0
    %v594 = vadd.f32 %v581, %v593
    %v595 = vpop.f32.mrf.mxu0
    %596 = vdwg.mxu0
    %v597 = vmax.f32 %v516, 0.0
    %v598 = vmax.f32 %v542, 0.0
    %v599 = vmax.f32 %v568, 0.0
    %v600 = vmax.f32 %v594, 0.0
    %v601 = vld [vmem:[#allocation5] sm:$0xf]
    %v602 = vld [vmem:[#allocation5 + $0x4] sm:$0xf]
    %v603 = vld [vmem:[#allocation5 + $0x8] sm:$0xf]
    %v604 = vld [vmem:[#allocation5 + $0xc] sm:$0xf]
    %v605 = vld [vmem:[#allocation5 + $0x10] sm:$0xf]
    %v606 = vld [vmem:[#allocation5 + $0x14] sm:$0xf]
    %v607 = vld [vmem:[#allocation5 + $0x18] sm:$0xf]
    %v608 = vld [vmem:[#allocation5 + $0x1c] sm:$0xf]
    %v609 = vld [vmem:[#allocation5 + $0x20] sm:$0xf]
    %v610 = vld [vmem:[#allocation5 + $0x24] sm:$0xf]
    %v611 = vld [vmem:[#allocation5 + $0x28] sm:$0xf]
    %v612 = vld [vmem:[#allocation5 + $0x2c] sm:$0xf]
    %v613 = vld [vmem:[#allocation5 + $0x30] sm:$0xf]
    %v614 = vld [vmem:[#allocation5 + $0x34] sm:$0xf]
    %v615 = vld [vmem:[#allocation5 + $0x38] sm:$0xf]
    %v616 = vld [vmem:[#allocation5 + $0x3c] sm:$0xf]
    %v617 = vld [vmem:[#allocation5 + $0x40] sm:$0xf]
    %v618 = vld [vmem:[#allocation5 + $0x44] sm:$0xf]
    %v619 = vld [vmem:[#allocation5 + $0x48] sm:$0xf]
    %v620 = vld [vmem:[#allocation5 + $0x4c] sm:$0xf]
    %v621 = vld [vmem:[#allocation5 + $0x50] sm:$0xf]
    %v622 = vld [vmem:[#allocation5 + $0x54] sm:$0xf]
    %v623 = vld [vmem:[#allocation5 + $0x58] sm:$0xf]
    %v624 = vld [vmem:[#allocation5 + $0x5c] sm:$0xf]
    %v625 = vld [vmem:[#allocation5 + $0x60] sm:$0xf]
    %v626 = vld [vmem:[#allocation5 + $0x64] sm:$0xf]
    %v627 = vld [vmem:[#allocation5 + $0x68] sm:$0xf]
    %v628 = vld [vmem:[#allocation5 + $0x6c] sm:$0xf]
    %v629 = vld [vmem:[#allocation5 + $0x70] sm:$0xf]
    %v630 = vld [vmem:[#allocation5 + $0x74] sm:$0xf]
    %v631 = vld [vmem:[#allocation5 + $0x78] sm:$0xf]
    %v632 = vld [vmem:[#allocation5 + $0x7c] sm:$0xf]
    %v633 = vld [vmem:[#allocation5 + $0x80] sm:$0xf]
    %v634 = vld [vmem:[#allocation5 + $0x84] sm:$0xf]
    %v635 = vld [vmem:[#allocation5 + $0x88] sm:$0xf]
    %v636 = vld [vmem:[#allocation5 + $0x8c] sm:$0xf]
    %v637 = vld [vmem:[#allocation5 + $0x90] sm:$0xf]
    %v638 = vld [vmem:[#allocation5 + $0x94] sm:$0xf]
    %v639 = vld [vmem:[#allocation5 + $0x98] sm:$0xf]
    %v640 = vld [vmem:[#allocation5 + $0x9c] sm:$0xf]
    %v641 = vld [vmem:[#allocation5 + $0xa0] sm:$0xf]
    %v642 = vld [vmem:[#allocation5 + $0xa4] sm:$0xf]
    %v643 = vld [vmem:[#allocation5 + $0xa8] sm:$0xf]
    %v644 = vld [vmem:[#allocation5 + $0xac] sm:$0xf]
    %v645 = vld [vmem:[#allocation5 + $0xb0] sm:$0xf]
    %v646 = vld [vmem:[#allocation5 + $0xb4] sm:$0xf]
    %v647 = vld [vmem:[#allocation5 + $0xb8] sm:$0xf]
    %v648 = vld [vmem:[#allocation5 + $0xbc] sm:$0xf]
    %v649 = vld [vmem:[#allocation5 + $0xc0] sm:$0xf]
    %v650 = vld [vmem:[#allocation5 + $0xc4] sm:$0xf]
    %v651 = vld [vmem:[#allocation5 + $0xc8] sm:$0xf]
    %v652 = vld [vmem:[#allocation5 + $0xcc] sm:$0xf]
    %v653 = vld [vmem:[#allocation5 + $0xd0] sm:$0xf]
    %v654 = vld [vmem:[#allocation5 + $0xd4] sm:$0xf]
    %v655 = vld [vmem:[#allocation5 + $0xd8] sm:$0xf]
    %v656 = vld [vmem:[#allocation5 + $0xdc] sm:$0xf]
    %v657 = vld [vmem:[#allocation5 + $0xe0] sm:$0xf]
    %v658 = vld [vmem:[#allocation5 + $0xe4] sm:$0xf]
    %v659 = vld [vmem:[#allocation5 + $0xe8] sm:$0xf]
    %v660 = vld [vmem:[#allocation5 + $0xec] sm:$0xf]
    %v661 = vld [vmem:[#allocation5 + $0xf0] sm:$0xf]
    %v662 = vld [vmem:[#allocation5 + $0xf4] sm:$0xf]
    %v663 = vld [vmem:[#allocation5 + $0xf8] sm:$0xf]
    %v664 = vld [vmem:[#allocation5 + $0xfc] sm:$0xf]
    %v665 = vld [vmem:[#allocation10 + $0x1] ss:$0 sm:$0xff]
    %v666 = vpack.c.bf16 %v597, %v597
    %v667 = vpack.c.bf16 %v598, %v598
    %v668 = vpack.c.bf16 %v599, %v599
    %v669 = vpack.c.bf16 %v600, %v600
    %v734 = vunpack.c.l.b16 %v601
    %v735 = vunpack.c.l.b16 %v602
    %v736 = vunpack.c.l.b16 %v603
    %v737 = vunpack.c.l.b16 %v604
    %v738 = vunpack.c.l.b16 %v605
    %v739 = vunpack.c.l.b16 %v606
    %v740 = vunpack.c.l.b16 %v607
    %v741 = vunpack.c.l.b16 %v608
    %v742 = vunpack.c.l.b16 %v609
    %v743 = vunpack.c.l.b16 %v610
    %v744 = vunpack.c.l.b16 %v611
    %v745 = vunpack.c.l.b16 %v612
    %v746 = vunpack.c.l.b16 %v613
    %v747 = vunpack.c.l.b16 %v614
    %v748 = vunpack.c.l.b16 %v615
    %v749 = vunpack.c.l.b16 %v616
    %v750 = vunpack.c.l.b16 %v617
    %v751 = vunpack.c.l.b16 %v618
    %v752 = vunpack.c.l.b16 %v619
    %v753 = vunpack.c.l.b16 %v620
    %v754 = vunpack.c.l.b16 %v621
    %v755 = vunpack.c.l.b16 %v622
    %v756 = vunpack.c.l.b16 %v623
    %v757 = vunpack.c.l.b16 %v624
    %v758 = vunpack.c.l.b16 %v625
    %v759 = vunpack.c.l.b16 %v626
    %v760 = vunpack.c.l.b16 %v627
    %v761 = vunpack.c.l.b16 %v628
    %v762 = vunpack.c.l.b16 %v629
    %v763 = vunpack.c.l.b16 %v630
    %v764 = vunpack.c.l.b16 %v631
    %v765 = vunpack.c.l.b16 %v632
    %v766 = vunpack.c.l.b16 %v633
    %v767 = vunpack.c.l.b16 %v634
    %v768 = vunpack.c.l.b16 %v635
    %v769 = vunpack.c.l.b16 %v636
    %v770 = vunpack.c.l.b16 %v637
    %v771 = vunpack.c.l.b16 %v638
    %v772 = vunpack.c.l.b16 %v639
    %v773 = vunpack.c.l.b16 %v640
    %v774 = vunpack.c.l.b16 %v641
    %v775 = vunpack.c.l.b16 %v642
    %v776 = vunpack.c.l.b16 %v643
    %v777 = vunpack.c.l.b16 %v644
    %v778 = vunpack.c.l.b16 %v645
    %v779 = vunpack.c.l.b16 %v646
    %v780 = vunpack.c.l.b16 %v647
    %v781 = vunpack.c.l.b16 %v648
    %v782 = vunpack.c.l.b16 %v649
    %v783 = vunpack.c.l.b16 %v650
    %v784 = vunpack.c.l.b16 %v651
    %v785 = vunpack.c.l.b16 %v652
    %v786 = vunpack.c.l.b16 %v653
    %v787 = vunpack.c.l.b16 %v654
    %v788 = vunpack.c.l.b16 %v655
    %v789 = vunpack.c.l.b16 %v656
    %v790 = vunpack.c.l.b16 %v657
    %v791 = vunpack.c.l.b16 %v658
    %v792 = vunpack.c.l.b16 %v659
    %v793 = vunpack.c.l.b16 %v660
    %v794 = vunpack.c.l.b16 %v661
    %v795 = vunpack.c.l.b16 %v662
    %v796 = vunpack.c.l.b16 %v663
    %v797 = vunpack.c.l.b16 %v664
    %v798 = vpack.c.b16 %v735, %v734
    %v799 = vpack.c.b16 %v737, %v736
    %v800 = vpack.c.b16 %v739, %v738
    %v801 = vpack.c.b16 %v741, %v740
    %v802 = vpack.c.b16 %v743, %v742
    %v803 = vpack.c.b16 %v745, %v744
    %v804 = vpack.c.b16 %v747, %v746
    %v805 = vpack.c.b16 %v749, %v748
    %v806 = vpack.c.b16 %v751, %v750
    %v807 = vpack.c.b16 %v753, %v752
    %v808 = vpack.c.b16 %v755, %v754
    %v809 = vpack.c.b16 %v757, %v756
    %v810 = vpack.c.b16 %v759, %v758
    %v811 = vpack.c.b16 %v761, %v760
    %v812 = vpack.c.b16 %v763, %v762
    %v813 = vpack.c.b16 %v765, %v764
    %v814 = vpack.c.b16 %v767, %v766
    %v815 = vpack.c.b16 %v769, %v768
    %v816 = vpack.c.b16 %v771, %v770
    %v817 = vpack.c.b16 %v773, %v772
    %v818 = vpack.c.b16 %v775, %v774
    %v819 = vpack.c.b16 %v777, %v776
    %v820 = vpack.c.b16 %v779, %v778
    %v821 = vpack.c.b16 %v781, %v780
    %v822 = vpack.c.b16 %v783, %v782
    %v823 = vpack.c.b16 %v785, %v784
    %v824 = vpack.c.b16 %v787, %v786
    %v825 = vpack.c.b16 %v789, %v788
    %v826 = vpack.c.b16 %v791, %v790
    %v827 = vpack.c.b16 %v793, %v792
    %v828 = vpack.c.b16 %v795, %v794
    %v829 = vpack.c.b16 %v797, %v796
    %862 = vmatpush.bf16.msra.mxu0 %v805
    %863 = vmatpush.bf16.msra.mxu0 %v804
    %864 = vmatpush.bf16.msra.mxu0 %v803
    %865 = vmatpush.bf16.msra.mxu0 %v802
    %866 = vmatpush.bf16.msra.mxu0 %v801
    %867 = vmatpush.bf16.msra.mxu0 %v800
    %868 = vmatpush.bf16.msra.mxu0 %v799
    %869 = vmatpush.bf16.msra.mxu0 %v798
    %870 = vmatmul.bf16.gmra.mxu0 %v666
    %v871 = vpop.f32.mrf.mxu0
    %v872 = vadd.f32 %v665, %v871
    %v873 = vpop.f32.mrf.mxu0
    %874 = vdwg.mxu0
    %875 = vmatpush.bf16.msra.mxu0 %v813
    %876 = vmatpush.bf16.msra.mxu0 %v812
    %877 = vmatpush.bf16.msra.mxu0 %v811
    %878 = vmatpush.bf16.msra.mxu0 %v810
    %879 = vmatpush.bf16.msra.mxu0 %v809
    %880 = vmatpush.bf16.msra.mxu0 %v808
    %881 = vmatpush.bf16.msra.mxu0 %v807
    %882 = vmatpush.bf16.msra.mxu0 %v806
    %883 = vmatmul.bf16.gmra.mxu0 %v667
    %v884 = vpop.f32.mrf.mxu0
    %v885 = vadd.f32 %v872, %v884
    %v886 = vpop.f32.mrf.mxu0
    %887 = vdwg.mxu0
    %888 = vmatpush.bf16.msra.mxu0 %v821
    %889 = vmatpush.bf16.msra.mxu0 %v820
    %890 = vmatpush.bf16.msra.mxu0 %v819
    %891 = vmatpush.bf16.msra.mxu0 %v818
    %892 = vmatpush.bf16.msra.mxu0 %v817
    %893 = vmatpush.bf16.msra.mxu0 %v816
    %894 = vmatpush.bf16.msra.mxu0 %v815
    %895 = vmatpush.bf16.msra.mxu0 %v814
    %896 = vmatmul.bf16.gmra.mxu0 %v668
    %v897 = vpop.f32.mrf.mxu0
    %v898 = vadd.f32 %v885, %v897
    %v899 = vpop.f32.mrf.mxu0
    %900 = vdwg.mxu0
    %901 = vmatpush.bf16.msra.mxu0 %v829
    %902 = vmatpush.bf16.msra.mxu0 %v828
    %903 = vmatpush.bf16.msra.mxu0 %v827
    %904 = vmatpush.bf16.msra.mxu0 %v826
    %905 = vmatpush.bf16.msra.mxu0 %v825
    %906 = vmatpush.bf16.msra.mxu0 %v824
    %907 = vmatpush.bf16.msra.mxu0 %v823
    %908 = vmatpush.bf16.msra.mxu0 %v822
    %909 = vmatmul.bf16.gmra.mxu0 %v669
    %v910 = vpop.f32.mrf.mxu0
    %v911 = vadd.f32 %v898, %v910
    %v912 = vpop.f32.mrf.mxu0
    %913 = vdwg.mxu0
    %v914 = vmax.f32 %v911, 0.0
    %v915 = vld [vmem:[#allocation5 + $0x100] sm:$0xf]
    %v916 = vld [vmem:[#allocation5 + $0x104] sm:$0xf]
    %v917 = vld [vmem:[#allocation5 + $0x108] sm:$0xf]
    %v918 = vld [vmem:[#allocation5 + $0x10c] sm:$0xf]
    %v919 = vld [vmem:[#allocation5 + $0x110] sm:$0xf]
    %v920 = vld [vmem:[#allocation5 + $0x114] sm:$0xf]
    %v921 = vld [vmem:[#allocation5 + $0x118] sm:$0xf]
    %v922 = vld [vmem:[#allocation5 + $0x11c] sm:$0xf]
    %v923 = vld [vmem:[#allocation5 + $0x120] sm:$0xf]
    %v924 = vld [vmem:[#allocation5 + $0x124] sm:$0xf]
    %v925 = vld [vmem:[#allocation5 + $0x128] sm:$0xf]
    %v926 = vld [vmem:[#allocation5 + $0x12c] sm:$0xf]
    %v927 = vld [vmem:[#allocation5 + $0x130] sm:$0xf]
    %v928 = vld [vmem:[#allocation5 + $0x134] sm:$0xf]
    %v929 = vld [vmem:[#allocation5 + $0x138] sm:$0xf]
    %v930 = vld [vmem:[#allocation5 + $0x13c] sm:$0xf]
    %v931 = vld [vmem:[#allocation10 + $0x2] ss:$0 sm:$0xff]
    %v932 = vpack.c.bf16 %v914, %v914
    %v949 = vunpack.c.l.b16 %v915
    %v950 = vunpack.c.l.b16 %v916
    %v951 = vunpack.c.l.b16 %v917
    %v952 = vunpack.c.l.b16 %v918
    %v953 = vunpack.c.l.b16 %v919
    %v954 = vunpack.c.l.b16 %v920
    %v955 = vunpack.c.l.b16 %v921
    %v956 = vunpack.c.l.b16 %v922
    %v957 = vunpack.c.l.b16 %v923
    %v958 = vunpack.c.l.b16 %v924
    %v959 = vunpack.c.l.b16 %v925
    %v960 = vunpack.c.l.b16 %v926
    %v961 = vunpack.c.l.b16 %v927
    %v962 = vunpack.c.l.b16 %v928
    %v963 = vunpack.c.l.b16 %v929
    %v964 = vunpack.c.l.b16 %v930
    %v965 = vpack.c.b16 %v950, %v949
    %v966 = vpack.c.b16 %v952, %v951
    %v967 = vpack.c.b16 %v954, %v953
    %v968 = vpack.c.b16 %v956, %v955
    %v969 = vpack.c.b16 %v958, %v957
    %v970 = vpack.c.b16 %v960, %v959
    %v971 = vpack.c.b16 %v962, %v961
    %v972 = vpack.c.b16 %v964, %v963
    %981 = vmatpush.bf16.msra.mxu0 %v972
    %982 = vmatpush.bf16.msra.mxu0 %v971
    %983 = vmatpush.bf16.msra.mxu0 %v970
    %984 = vmatpush.bf16.msra.mxu0 %v969
    %985 = vmatpush.bf16.msra.mxu0 %v968
    %986 = vmatpush.bf16.msra.mxu0 %v967
    %987 = vmatpush.bf16.msra.mxu0 %v966
    %988 = vmatpush.bf16.msra.mxu0 %v965
    %989 = vmatmul.bf16.gmra.mxu0 %v932
    %v990 = vpop.f32.mrf.mxu0
    %v991 = vadd.f32 %v931, %v990
    %v992 = vpop.f32.mrf.mxu0
    %993 = vdwg.mxu0
    %v994 = vmax.f32 %v991, 0.0
    %v995 = vld [vmem:[#allocation5 + $0x140] sm:$0xf]
    %v996 = vld [vmem:[#allocation5 + $0x144] sm:$0xf]
    %v997 = vld [vmem:[#allocation5 + $0x148] sm:$0xf]
    %v998 = vld [vmem:[#allocation5 + $0x14c] sm:$0xf]
    %v999 = vld [vmem:[#allocation5 + $0x150] sm:$0xf]
    %v1000 = vld [vmem:[#allocation5 + $0x154] sm:$0xf]
    %v1001 = vld [vmem:[#allocation5 + $0x158] sm:$0xf]
    %v1002 = vld [vmem:[#allocation5 + $0x15c] sm:$0xf]
    %v1003 = vld [vmem:[#allocation5 + $0x160] sm:$0xf]
    %v1004 = vld [vmem:[#allocation5 + $0x164] sm:$0xf]
    %v1005 = vld [vmem:[#allocation5 + $0x168] sm:$0xf]
    %v1006 = vld [vmem:[#allocation5 + $0x16c] sm:$0xf]
    %v1007 = vld [vmem:[#allocation5 + $0x170] sm:$0xf]
    %v1008 = vld [vmem:[#allocation5 + $0x174] sm:$0xf]
    %v1009 = vld [vmem:[#allocation5 + $0x178] sm:$0xf]
    %v1010 = vld [vmem:[#allocation5 + $0x17c] sm:$0xf]
    %v1011 = vld [vmem:[#allocation10 + $0x3] ss:$0 sm:$0xff]
    %v1012 = vpack.c.bf16 %v994, %v994
    %v1029 = vunpack.c.l.b16 %v995
    %v1030 = vunpack.c.l.b16 %v996
    %v1031 = vunpack.c.l.b16 %v997
    %v1032 = vunpack.c.l.b16 %v998
    %v1033 = vunpack.c.l.b16 %v999
    %v1034 = vunpack.c.l.b16 %v1000
    %v1035 = vunpack.c.l.b16 %v1001
    %v1036 = vunpack.c.l.b16 %v1002
    %v1037 = vunpack.c.l.b16 %v1003
    %v1038 = vunpack.c.l.b16 %v1004
    %v1039 = vunpack.c.l.b16 %v1005
    %v1040 = vunpack.c.l.b16 %v1006
    %v1041 = vunpack.c.l.b16 %v1007
    %v1042 = vunpack.c.l.b16 %v1008
    %v1043 = vunpack.c.l.b16 %v1009
    %v1044 = vunpack.c.l.b16 %v1010
    %v1045 = vpack.c.b16 %v1030, %v1029
    %v1046 = vpack.c.b16 %v1032, %v1031
    %v1047 = vpack.c.b16 %v1034, %v1033
    %v1048 = vpack.c.b16 %v1036, %v1035
    %v1049 = vpack.c.b16 %v1038, %v1037
    %v1050 = vpack.c.b16 %v1040, %v1039
    %v1051 = vpack.c.b16 %v1042, %v1041
    %v1052 = vpack.c.b16 %v1044, %v1043
    %1061 = vmatpush.bf16.msra.mxu0 %v1052
    %1062 = vmatpush.bf16.msra.mxu0 %v1051
    %1063 = vmatpush.bf16.msra.mxu0 %v1050
    %1064 = vmatpush.bf16.msra.mxu0 %v1049
    %1065 = vmatpush.bf16.msra.mxu0 %v1048
    %1066 = vmatpush.bf16.msra.mxu0 %v1047
    %1067 = vmatpush.bf16.msra.mxu0 %v1046
    %1068 = vmatpush.bf16.msra.mxu0 %v1045
    %1069 = vmatmul.bf16.gmra.mxu0 %v1012
    %v1070 = vpop.f32.mrf.mxu0
    %v1071 = vadd.f32 %v1011, %v1070
    %v1072 = vpop.f32.mrf.mxu0
    %1073 = vdwg.mxu0
    %v1074 = vmax.f32 %v1071, 0.0
    %v1075 = vld [vmem:[#allocation5 + $0x180] sm:$0xf]
    %v1076 = vld [vmem:[#allocation5 + $0x184] sm:$0xf]
    %v1077 = vld [vmem:[#allocation5 + $0x188] sm:$0xf]
    %v1078 = vld [vmem:[#allocation5 + $0x18c] sm:$0xf]
    %v1079 = vld [vmem:[#allocation5 + $0x190] sm:$0xf]
    %v1080 = vld [vmem:[#allocation5 + $0x194] sm:$0xf]
    %v1081 = vld [vmem:[#allocation5 + $0x198] sm:$0xf]
    %v1082 = vld [vmem:[#allocation5 + $0x19c] sm:$0xf]
    %v1083 = vld [vmem:[#allocation5 + $0x1a0] sm:$0xf]
    %v1084 = vld [vmem:[#allocation5 + $0x1a4] sm:$0xf]
    %v1085 = vld [vmem:[#allocation5 + $0x1a8] sm:$0xf]
    %v1086 = vld [vmem:[#allocation5 + $0x1ac] sm:$0xf]
    %v1087 = vld [vmem:[#allocation5 + $0x1b0] sm:$0xf]
    %v1088 = vld [vmem:[#allocation5 + $0x1b4] sm:$0xf]
    %v1089 = vld [vmem:[#allocation5 + $0x1b8] sm:$0xf]
    %v1090 = vld [vmem:[#allocation5 + $0x1bc] sm:$0xf]
    %v1091 = vld [vmem:[#allocation10 + $0x4] ss:$0 sm:$0xff]
    %v1092 = vpack.c.bf16 %v1074, %v1074
    %v1109 = vunpack.c.l.b16 %v1075
    %v1110 = vunpack.c.l.b16 %v1076
    %v1111 = vunpack.c.l.b16 %v1077
    %v1112 = vunpack.c.l.b16 %v1078
    %v1113 = vunpack.c.l.b16 %v1079
    %v1114 = vunpack.c.l.b16 %v1080
    %v1115 = vunpack.c.l.b16 %v1081
    %v1116 = vunpack.c.l.b16 %v1082
    %v1117 = vunpack.c.l.b16 %v1083
    %v1118 = vunpack.c.l.b16 %v1084
    %v1119 = vunpack.c.l.b16 %v1085
    %v1120 = vunpack.c.l.b16 %v1086
    %v1121 = vunpack.c.l.b16 %v1087
    %v1122 = vunpack.c.l.b16 %v1088
    %v1123 = vunpack.c.l.b16 %v1089
    %v1124 = vunpack.c.l.b16 %v1090
    %v1125 = vpack.c.b16 %v1110, %v1109
    %v1126 = vpack.c.b16 %v1112, %v1111
    %v1127 = vpack.c.b16 %v1114, %v1113
    %v1128 = vpack.c.b16 %v1116, %v1115
    %v1129 = vpack.c.b16 %v1118, %v1117
    %v1130 = vpack.c.b16 %v1120, %v1119
    %v1131 = vpack.c.b16 %v1122, %v1121
    %v1132 = vpack.c.b16 %v1124, %v1123
    %1141 = vmatpush.bf16.msra.mxu0 %v1132
    %1142 = vmatpush.bf16.msra.mxu0 %v1131
    %1143 = vmatpush.bf16.msra.mxu0 %v1130
    %1144 = vmatpush.bf16.msra.mxu0 %v1129
    %1145 = vmatpush.bf16.msra.mxu0 %v1128
    %1146 = vmatpush.bf16.msra.mxu0 %v1127
    %1147 = vmatpush.bf16.msra.mxu0 %v1126
    %1148 = vmatpush.bf16.msra.mxu0 %v1125
    %1149 = vmatmul.bf16.gmra.mxu0 %v1092
    %v1150 = vpop.f32.mrf.mxu0
    %v1151 = vadd.f32 %v1091, %v1150
    %v1152 = vpop.f32.mrf.mxu0
    %1153 = vdwg.mxu0
    %v1154 = vmax.f32 %v1151, 0.0
    %v1155 = vld [vmem:[#allocation5 + $0x1c0] sm:$0xf]
    %v1156 = vld [vmem:[#allocation5 + $0x1c4] sm:$0xf]
    %v1157 = vld [vmem:[#allocation5 + $0x1c8] sm:$0xf]
    %v1158 = vld [vmem:[#allocation5 + $0x1cc] sm:$0xf]
    %v1159 = vld [vmem:[#allocation5 + $0x1d0] sm:$0xf]
    %v1160 = vld [vmem:[#allocation5 + $0x1d4] sm:$0xf]
    %v1161 = vld [vmem:[#allocation5 + $0x1d8] sm:$0xf]
    %v1162 = vld [vmem:[#allocation5 + $0x1dc] sm:$0xf]
    %v1163 = vld [vmem:[#allocation5 + $0x1e0] sm:$0xf]
    %v1164 = vld [vmem:[#allocation5 + $0x1e4] sm:$0xf]
    %v1165 = vld [vmem:[#allocation5 + $0x1e8] sm:$0xf]
    %v1166 = vld [vmem:[#allocation5 + $0x1ec] sm:$0xf]
    %v1167 = vld [vmem:[#allocation5 + $0x1f0] sm:$0xf]
    %v1168 = vld [vmem:[#allocation5 + $0x1f4] sm:$0xf]
    %v1169 = vld [vmem:[#allocation5 + $0x1f8] sm:$0xf]
    %v1170 = vld [vmem:[#allocation5 + $0x1fc] sm:$0xf]
    %v1171 = vld [vmem:[#allocation10 + $0x5] ss:$0 sm:$0xff]
    %v1172 = vpack.c.bf16 %v1154, %v1154
    %v1189 = vunpack.c.l.b16 %v1155
    %v1190 = vunpack.c.l.b16 %v1156
    %v1191 = vunpack.c.l.b16 %v1157
    %v1192 = vunpack.c.l.b16 %v1158
    %v1193 = vunpack.c.l.b16 %v1159
    %v1194 = vunpack.c.l.b16 %v1160
    %v1195 = vunpack.c.l.b16 %v1161
    %v1196 = vunpack.c.l.b16 %v1162
    %v1197 = vunpack.c.l.b16 %v1163
    %v1198 = vunpack.c.l.b16 %v1164
    %v1199 = vunpack.c.l.b16 %v1165
    %v1200 = vunpack.c.l.b16 %v1166
    %v1201 = vunpack.c.l.b16 %v1167
    %v1202 = vunpack.c.l.b16 %v1168
    %v1203 = vunpack.c.l.b16 %v1169
    %v1204 = vunpack.c.l.b16 %v1170
    %v1205 = vpack.c.b16 %v1190, %v1189
    %v1206 = vpack.c.b16 %v1192, %v1191
    %v1207 = vpack.c.b16 %v1194, %v1193
    %v1208 = vpack.c.b16 %v1196, %v1195
    %v1209 = vpack.c.b16 %v1198, %v1197
    %v1210 = vpack.c.b16 %v1200, %v1199
    %v1211 = vpack.c.b16 %v1202, %v1201
    %v1212 = vpack.c.b16 %v1204, %v1203
    %1221 = vmatpush.bf16.msra.mxu0 %v1212
    %1222 = vmatpush.bf16.msra.mxu0 %v1211
    %1223 = vmatpush.bf16.msra.mxu0 %v1210
    %1224 = vmatpush.bf16.msra.mxu0 %v1209
    %1225 = vmatpush.bf16.msra.mxu0 %v1208
    %1226 = vmatpush.bf16.msra.mxu0 %v1207
    %1227 = vmatpush.bf16.msra.mxu0 %v1206
    %1228 = vmatpush.bf16.msra.mxu0 %v1205
    %1229 = vmatmul.bf16.gmra.mxu0 %v1172
    %v1230 = vpop.f32.mrf.mxu0
    %v1231 = vadd.f32 %v1171, %v1230
    %v1232 = vpop.f32.mrf.mxu0
    %1233 = vdwg.mxu0
    %v1234 = vmax.f32 %v1231, 0.0
    %v1235 = vld [vmem:[#allocation8 + $0x200] sm:$0xff]
    %v1236 = vld [vmem:[#allocation8 + $0x208] sm:$0xff]
    %v1237 = vld [vmem:[#allocation8 + $0x210] sm:$0xff]
    %v1238 = vld [vmem:[#allocation8 + $0x218] sm:$0xff]
    %v1239 = vld [vmem:[#allocation8 + $0x220] sm:$0xff]
    %v1240 = vld [vmem:[#allocation8 + $0x228] sm:$0xff]
    %v1241 = vld [vmem:[#allocation8 + $0x230] sm:$0xff]
    %v1242 = vld [vmem:[#allocation8 + $0x238] sm:$0xff]
    %v1243 = vld [vmem:[#allocation8 + $0x240] sm:$0xff]
    %v1244 = vld [vmem:[#allocation8 + $0x248] sm:$0xff]
    %v1245 = vld [vmem:[#allocation8 + $0x250] sm:$0xff]
    %v1246 = vld [vmem:[#allocation8 + $0x258] sm:$0xff]
    %v1247 = vld [vmem:[#allocation8 + $0x260] sm:$0xff]
    %v1248 = vld [vmem:[#allocation8 + $0x268] sm:$0xff]
    %v1249 = vld [vmem:[#allocation8 + $0x270] sm:$0xff]
    %v1250 = vld [vmem:[#allocation8 + $0x278] sm:$0xff]
    %v1251 = vld [vmem:[#allocation8 + $0x280] sm:$0xff]
    %v1252 = vld [vmem:[#allocation8 + $0x288] sm:$0xff]
    %v1253 = vld [vmem:[#allocation8 + $0x290] sm:$0xff]
    %v1254 = vld [vmem:[#allocation8 + $0x298] sm:$0xff]
    %v1255 = vld [vmem:[#allocation8 + $0x2a0] sm:$0xff]
    %v1256 = vld [vmem:[#allocation8 + $0x2a8] sm:$0xff]
    %v1257 = vld [vmem:[#allocation8 + $0x2b0] sm:$0xff]
    %v1258 = vld [vmem:[#allocation8 + $0x2b8] sm:$0xff]
    %v1259 = vld [vmem:[#allocation8 + $0x2c0] sm:$0xff]
    %v1260 = vld [vmem:[#allocation8 + $0x2c8] sm:$0xff]
    %v1261 = vld [vmem:[#allocation8 + $0x2d0] sm:$0xff]
    %v1262 = vld [vmem:[#allocation8 + $0x2d8] sm:$0xff]
    %v1263 = vld [vmem:[#allocation8 + $0x2e0] sm:$0xff]
    %v1264 = vld [vmem:[#allocation8 + $0x2e8] sm:$0xff]
    %v1265 = vld [vmem:[#allocation8 + $0x2f0] sm:$0xff]
    %v1266 = vld [vmem:[#allocation8 + $0x2f8] sm:$0xff]
    %s1267 = scalar_lea.vmem [#allocation10], 6
    %v1268 = vld [vmem:[%s1267] ss:$8 sm:$0xf]
    %v1269 = vpack.c.bf16 %v1234, %v1234
    %v1271 = vperm.slane %v1268, 0
    %v1272 = vperm.slane %v1268, 1
    %v1273 = vperm.slane %v1268, 2
    %v1274 = vperm.slane %v1268, 3
    %v1311 = vunpack.c.l.b16 %v1235
    %v1312 = vunpack.c.h.b16 %v1235
    %v1313 = vunpack.c.l.b16 %v1236
    %v1314 = vunpack.c.h.b16 %v1236
    %v1315 = vunpack.c.l.b16 %v1237
    %v1316 = vunpack.c.h.b16 %v1237
    %v1317 = vunpack.c.l.b16 %v1238
    %v1318 = vunpack.c.h.b16 %v1238
    %v1319 = vunpack.c.l.b16 %v1239
    %v1320 = vunpack.c.h.b16 %v1239
    %v1321 = vunpack.c.l.b16 %v1240
    %v1322 = vunpack.c.h.b16 %v1240
    %v1323 = vunpack.c.l.b16 %v1241
    %v1324 = vunpack.c.h.b16 %v1241
    %v1325 = vunpack.c.l.b16 %v1242
    %v1326 = vunpack.c.h.b16 %v1242
    %v1327 = vunpack.c.l.b16 %v1243
    %v1328 = vunpack.c.h.b16 %v1243
    %v1329 = vunpack.c.l.b16 %v1244
    %v1330 = vunpack.c.h.b16 %v1244
    %v1331 = vunpack.c.l.b16 %v1245
    %v1332 = vunpack.c.h.b16 %v1245
    %v1333 = vunpack.c.l.b16 %v1246
    %v1334 = vunpack.c.h.b16 %v1246
    %v1335 = vunpack.c.l.b16 %v1247
    %v1336 = vunpack.c.h.b16 %v1247
    %v1337 = vunpack.c.l.b16 %v1248
    %v1338 = vunpack.c.h.b16 %v1248
    %v1339 = vunpack.c.l.b16 %v1249
    %v1340 = vunpack.c.h.b16 %v1249
    %v1341 = vunpack.c.l.b16 %v1250
    %v1342 = vunpack.c.h.b16 %v1250
    %v1343 = vunpack.c.l.b16 %v1251
    %v1344 = vunpack.c.h.b16 %v1251
    %v1345 = vunpack.c.l.b16 %v1252
    %v1346 = vunpack.c.h.b16 %v1252
    %v1347 = vunpack.c.l.b16 %v1253
    %v1348 = vunpack.c.h.b16 %v1253
    %v1349 = vunpack.c.l.b16 %v1254
    %v1350 = vunpack.c.h.b16 %v1254
    %v1351 = vunpack.c.l.b16 %v1255
    %v1352 = vunpack.c.h.b16 %v1255
    %v1353 = vunpack.c.l.b16 %v1256
    %v1354 = vunpack.c.h.b16 %v1256
    %v1355 = vunpack.c.l.b16 %v1257
    %v1356 = vunpack.c.h.b16 %v1257
    %v1357 = vunpack.c.l.b16 %v1258
    %v1358 = vunpack.c.h.b16 %v1258
    %v1359 = vunpack.c.l.b16 %v1259
    %v1360 = vunpack.c.h.b16 %v1259
    %v1361 = vunpack.c.l.b16 %v1260
    %v1362 = vunpack.c.h.b16 %v1260
    %v1363 = vunpack.c.l.b16 %v1261
    %v1364 = vunpack.c.h.b16 %v1261
    %v1365 = vunpack.c.l.b16 %v1262
    %v1366 = vunpack.c.h.b16 %v1262
    %v1367 = vunpack.c.l.b16 %v1263
    %v1368 = vunpack.c.h.b16 %v1263
    %v1369 = vunpack.c.l.b16 %v1264
    %v1370 = vunpack.c.h.b16 %v1264
    %v1371 = vunpack.c.l.b16 %v1265
    %v1372 = vunpack.c.h.b16 %v1265
    %v1373 = vunpack.c.l.b16 %v1266
    %v1374 = vunpack.c.h.b16 %v1266
    %v1375 = vpack.c.b16 %v1315, %v1311
    %v1376 = vpack.c.b16 %v1316, %v1312
    %v1377 = vpack.c.b16 %v1317, %v1313
    %v1378 = vpack.c.b16 %v1318, %v1314
    %v1379 = vpack.c.b16 %v1323, %v1319
    %v1380 = vpack.c.b16 %v1324, %v1320
    %v1381 = vpack.c.b16 %v1325, %v1321
    %v1382 = vpack.c.b16 %v1326, %v1322
    %v1383 = vpack.c.b16 %v1331, %v1327
    %v1384 = vpack.c.b16 %v1332, %v1328
    %v1385 = vpack.c.b16 %v1333, %v1329
    %v1386 = vpack.c.b16 %v1334, %v1330
    %v1387 = vpack.c.b16 %v1339, %v1335
    %v1388 = vpack.c.b16 %v1340, %v1336
    %v1389 = vpack.c.b16 %v1341, %v1337
    %v1390 = vpack.c.b16 %v1342, %v1338
    %v1391 = vpack.c.b16 %v1347, %v1343
    %v1392 = vpack.c.b16 %v1348, %v1344
    %v1393 = vpack.c.b16 %v1349, %v1345
    %v1394 = vpack.c.b16 %v1350, %v1346
    %v1395 = vpack.c.b16 %v1355, %v1351
    %v1396 = vpack.c.b16 %v1356, %v1352
    %v1397 = vpack.c.b16 %v1357, %v1353
    %v1398 = vpack.c.b16 %v1358, %v1354
    %v1399 = vpack.c.b16 %v1363, %v1359
    %v1400 = vpack.c.b16 %v1364, %v1360
    %v1401 = vpack.c.b16 %v1365, %v1361
    %v1402 = vpack.c.b16 %v1366, %v1362
    %v1403 = vpack.c.b16 %v1371, %v1367
    %v1404 = vpack.c.b16 %v1372, %v1368
    %v1405 = vpack.c.b16 %v1373, %v1369
    %v1406 = vpack.c.b16 %v1374, %v1370
    %1439 = vmatpush.bf16.msra.mxu0 %v1403
    %1440 = vmatpush.bf16.msra.mxu0 %v1399
    %1441 = vmatpush.bf16.msra.mxu0 %v1395
    %1442 = vmatpush.bf16.msra.mxu0 %v1391
    %1443 = vmatpush.bf16.msra.mxu0 %v1387
    %1444 = vmatpush.bf16.msra.mxu0 %v1383
    %1445 = vmatpush.bf16.msra.mxu0 %v1379
    %1446 = vmatpush.bf16.msra.mxu0 %v1375
    %1447 = vmatmul.bf16.gmra.mxu0 %v1269
    %v1448 = vpop.f32.mrf.mxu0
    %v1449 = vadd.f32 %v1271, %v1448
    %v1450 = vpop.f32.mrf.mxu0
    %1451 = vdwg.mxu0
    %1452 = vmatpush.bf16.msra.mxu0 %v1404
    %1453 = vmatpush.bf16.msra.mxu0 %v1400
    %1454 = vmatpush.bf16.msra.mxu0 %v1396
    %1455 = vmatpush.bf16.msra.mxu0 %v1392
    %1456 = vmatpush.bf16.msra.mxu0 %v1388
    %1457 = vmatpush.bf16.msra.mxu0 %v1384
    %1458 = vmatpush.bf16.msra.mxu0 %v1380
    %1459 = vmatpush.bf16.msra.mxu0 %v1376
    %1460 = vmatmul.bf16.gmra.mxu0 %v1269
    %v1461 = vpop.f32.mrf.mxu0
    %v1462 = vadd.f32 %v1272, %v1461
    %v1463 = vpop.f32.mrf.mxu0
    %1464 = vdwg.mxu0
    %1465 = vmatpush.bf16.msra.mxu0 %v1405
    %1466 = vmatpush.bf16.msra.mxu0 %v1401
    %1467 = vmatpush.bf16.msra.mxu0 %v1397
    %1468 = vmatpush.bf16.msra.mxu0 %v1393
    %1469 = vmatpush.bf16.msra.mxu0 %v1389
    %1470 = vmatpush.bf16.msra.mxu0 %v1385
    %1471 = vmatpush.bf16.msra.mxu0 %v1381
    %1472 = vmatpush.bf16.msra.mxu0 %v1377
    %1473 = vmatmul.bf16.gmra.mxu0 %v1269
    %v1474 = vpop.f32.mrf.mxu0
    %v1475 = vadd.f32 %v1273, %v1474
    %v1476 = vpop.f32.mrf.mxu0
    %1477 = vdwg.mxu0
    %1478 = vmatpush.bf16.msra.mxu0 %v1406
    %1479 = vmatpush.bf16.msra.mxu0 %v1402
    %1480 = vmatpush.bf16.msra.mxu0 %v1398
    %1481 = vmatpush.bf16.msra.mxu0 %v1394
    %1482 = vmatpush.bf16.msra.mxu0 %v1390
    %1483 = vmatpush.bf16.msra.mxu0 %v1386
    %1484 = vmatpush.bf16.msra.mxu0 %v1382
    %1485 = vmatpush.bf16.msra.mxu0 %v1378
    %1486 = vmatmul.bf16.gmra.mxu0 %v1269
    %v1487 = vpop.f32.mrf.mxu0
    %v1488 = vadd.f32 %v1274, %v1487
    %v1489 = vpop.f32.mrf.mxu0
    %1490 = vdwg.mxu0
    %v1491 = vmax.f32 %v1449, 0.0
    %v1492 = vmax.f32 %v1462, 0.0
    %v1493 = vmax.f32 %v1475, 0.0
    %v1494 = vmax.f32 %v1488, 0.0
    %v1495 = vld [vmem:[#allocation7] sm:$0xff]
    %v1496 = vld [vmem:[#allocation7 + $0x8] sm:$0xff]
    %v1497 = vld [vmem:[#allocation7 + $0x10] sm:$0xff]
    %v1498 = vld [vmem:[#allocation7 + $0x18] sm:$0xff]
    %v1499 = vld [vmem:[#allocation7 + $0x20] sm:$0xff]
    %v1500 = vld [vmem:[#allocation7 + $0x28] sm:$0xff]
    %v1501 = vld [vmem:[#allocation7 + $0x30] sm:$0xff]
    %v1502 = vld [vmem:[#allocation7 + $0x38] sm:$0xff]
    %v1503 = vld [vmem:[#allocation7 + $0x40] sm:$0xff]
    %v1504 = vld [vmem:[#allocation7 + $0x48] sm:$0xff]
    %v1505 = vld [vmem:[#allocation7 + $0x50] sm:$0xff]
    %v1506 = vld [vmem:[#allocation7 + $0x58] sm:$0xff]
    %v1507 = vld [vmem:[#allocation7 + $0x60] sm:$0xff]
    %v1508 = vld [vmem:[#allocation7 + $0x68] sm:$0xff]
    %v1509 = vld [vmem:[#allocation7 + $0x70] sm:$0xff]
    %v1510 = vld [vmem:[#allocation7 + $0x78] sm:$0xff]
    %v1511 = vld [vmem:[#allocation7 + $0x80] sm:$0xff]
    %v1512 = vld [vmem:[#allocation7 + $0x88] sm:$0xff]
    %v1513 = vld [vmem:[#allocation7 + $0x90] sm:$0xff]
    %v1514 = vld [vmem:[#allocation7 + $0x98] sm:$0xff]
    %v1515 = vld [vmem:[#allocation7 + $0xa0] sm:$0xff]
    %v1516 = vld [vmem:[#allocation7 + $0xa8] sm:$0xff]
    %v1517 = vld [vmem:[#allocation7 + $0xb0] sm:$0xff]
    %v1518 = vld [vmem:[#allocation7 + $0xb8] sm:$0xff]
    %v1519 = vld [vmem:[#allocation7 + $0xc0] sm:$0xff]
    %v1520 = vld [vmem:[#allocation7 + $0xc8] sm:$0xff]
    %v1521 = vld [vmem:[#allocation7 + $0xd0] sm:$0xff]
    %v1522 = vld [vmem:[#allocation7 + $0xd8] sm:$0xff]
    %v1523 = vld [vmem:[#allocation7 + $0xe0] sm:$0xff]
    %v1524 = vld [vmem:[#allocation7 + $0xe8] sm:$0xff]
    %v1525 = vld [vmem:[#allocation7 + $0xf0] sm:$0xff]
    %v1526 = vld [vmem:[#allocation7 + $0xf8] sm:$0xff]
    %v1527 = vld [vmem:[#allocation7 + $0x100] sm:$0xff]
    %v1528 = vld [vmem:[#allocation7 + $0x108] sm:$0xff]
    %v1529 = vld [vmem:[#allocation7 + $0x110] sm:$0xff]
    %v1530 = vld [vmem:[#allocation7 + $0x118] sm:$0xff]
    %v1531 = vld [vmem:[#allocation7 + $0x120] sm:$0xff]
    %v1532 = vld [vmem:[#allocation7 + $0x128] sm:$0xff]
    %v1533 = vld [vmem:[#allocation7 + $0x130] sm:$0xff]
    %v1534 = vld [vmem:[#allocation7 + $0x138] sm:$0xff]
    %v1535 = vld [vmem:[#allocation7 + $0x140] sm:$0xff]
    %v1536 = vld [vmem:[#allocation7 + $0x148] sm:$0xff]
    %v1537 = vld [vmem:[#allocation7 + $0x150] sm:$0xff]
    %v1538 = vld [vmem:[#allocation7 + $0x158] sm:$0xff]
    %v1539 = vld [vmem:[#allocation7 + $0x160] sm:$0xff]
    %v1540 = vld [vmem:[#allocation7 + $0x168] sm:$0xff]
    %v1541 = vld [vmem:[#allocation7 + $0x170] sm:$0xff]
    %v1542 = vld [vmem:[#allocation7 + $0x178] sm:$0xff]
    %v1543 = vld [vmem:[#allocation7 + $0x180] sm:$0xff]
    %v1544 = vld [vmem:[#allocation7 + $0x188] sm:$0xff]
    %v1545 = vld [vmem:[#allocation7 + $0x190] sm:$0xff]
    %v1546 = vld [vmem:[#allocation7 + $0x198] sm:$0xff]
    %v1547 = vld [vmem:[#allocation7 + $0x1a0] sm:$0xff]
    %v1548 = vld [vmem:[#allocation7 + $0x1a8] sm:$0xff]
    %v1549 = vld [vmem:[#allocation7 + $0x1b0] sm:$0xff]
    %v1550 = vld [vmem:[#allocation7 + $0x1b8] sm:$0xff]
    %v1551 = vld [vmem:[#allocation7 + $0x1c0] sm:$0xff]
    %v1552 = vld [vmem:[#allocation7 + $0x1c8] sm:$0xff]
    %v1553 = vld [vmem:[#allocation7 + $0x1d0] sm:$0xff]
    %v1554 = vld [vmem:[#allocation7 + $0x1d8] sm:$0xff]
    %v1555 = vld [vmem:[#allocation7 + $0x1e0] sm:$0xff]
    %v1556 = vld [vmem:[#allocation7 + $0x1e8] sm:$0xff]
    %v1557 = vld [vmem:[#allocation7 + $0x1f0] sm:$0xff]
    %v1558 = vld [vmem:[#allocation7 + $0x1f8] sm:$0xff]
    %s1559 = scalar_lea.vmem [#allocation10], 7
    %v1560 = vld [vmem:[%s1559] ss:$8 sm:$0x3]
    %v1561 = vpack.c.bf16 %v1491, %v1491
    %v1562 = vpack.c.bf16 %v1492, %v1492
    %v1563 = vpack.c.bf16 %v1493, %v1493
    %v1564 = vpack.c.bf16 %v1494, %v1494
    %v1566 = vperm.slane %v1560, 0
    %v1567 = vperm.slane %v1560, 1
    %v1634 = vunpack.c.l.b16 %v1495
    %v1635 = vunpack.c.h.b16 %v1495
    %v1636 = vunpack.c.l.b16 %v1496
    %v1637 = vunpack.c.h.b16 %v1496
    %v1638 = vunpack.c.l.b16 %v1497
    %v1639 = vunpack.c.h.b16 %v1497
    %v1640 = vunpack.c.l.b16 %v1498
    %v1641 = vunpack.c.h.b16 %v1498
    %v1642 = vunpack.c.l.b16 %v1499
    %v1643 = vunpack.c.h.b16 %v1499
    %v1644 = vunpack.c.l.b16 %v1500
    %v1645 = vunpack.c.h.b16 %v1500
    %v1646 = vunpack.c.l.b16 %v1501
    %v1647 = vunpack.c.h.b16 %v1501
    %v1648 = vunpack.c.l.b16 %v1502
    %v1649 = vunpack.c.h.b16 %v1502
    %v1650 = vunpack.c.l.b16 %v1503
    %v1651 = vunpack.c.h.b16 %v1503
    %v1652 = vunpack.c.l.b16 %v1504
    %v1653 = vunpack.c.h.b16 %v1504
    %v1654 = vunpack.c.l.b16 %v1505
    %v1655 = vunpack.c.h.b16 %v1505
    %v1656 = vunpack.c.l.b16 %v1506
    %v1657 = vunpack.c.h.b16 %v1506
    %v1658 = vunpack.c.l.b16 %v1507
    %v1659 = vunpack.c.h.b16 %v1507
    %v1660 = vunpack.c.l.b16 %v1508
    %v1661 = vunpack.c.h.b16 %v1508
    %v1662 = vunpack.c.l.b16 %v1509
    %v1663 = vunpack.c.h.b16 %v1509
    %v1664 = vunpack.c.l.b16 %v1510
    %v1665 = vunpack.c.h.b16 %v1510
    %v1666 = vunpack.c.l.b16 %v1511
    %v1667 = vunpack.c.h.b16 %v1511
    %v1668 = vunpack.c.l.b16 %v1512
    %v1669 = vunpack.c.h.b16 %v1512
    %v1670 = vunpack.c.l.b16 %v1513
    %v1671 = vunpack.c.h.b16 %v1513
    %v1672 = vunpack.c.l.b16 %v1514
    %v1673 = vunpack.c.h.b16 %v1514
    %v1674 = vunpack.c.l.b16 %v1515
    %v1675 = vunpack.c.h.b16 %v1515
    %v1676 = vunpack.c.l.b16 %v1516
    %v1677 = vunpack.c.h.b16 %v1516
    %v1678 = vunpack.c.l.b16 %v1517
    %v1679 = vunpack.c.h.b16 %v1517
    %v1680 = vunpack.c.l.b16 %v1518
    %v1681 = vunpack.c.h.b16 %v1518
    %v1682 = vunpack.c.l.b16 %v1519
    %v1683 = vunpack.c.h.b16 %v1519
    %v1684 = vunpack.c.l.b16 %v1520
    %v1685 = vunpack.c.h.b16 %v1520
    %v1686 = vunpack.c.l.b16 %v1521
    %v1687 = vunpack.c.h.b16 %v1521
    %v1688 = vunpack.c.l.b16 %v1522
    %v1689 = vunpack.c.h.b16 %v1522
    %v1690 = vunpack.c.l.b16 %v1523
    %v1691 = vunpack.c.h.b16 %v1523
    %v1692 = vunpack.c.l.b16 %v1524
    %v1693 = vunpack.c.h.b16 %v1524
    %v1694 = vunpack.c.l.b16 %v1525
    %v1695 = vunpack.c.h.b16 %v1525
    %v1696 = vunpack.c.l.b16 %v1526
    %v1697 = vunpack.c.h.b16 %v1526
    %v1698 = vunpack.c.l.b16 %v1527
    %v1699 = vunpack.c.h.b16 %v1527
    %v1700 = vunpack.c.l.b16 %v1528
    %v1701 = vunpack.c.h.b16 %v1528
    %v1702 = vunpack.c.l.b16 %v1529
    %v1703 = vunpack.c.h.b16 %v1529
    %v1704 = vunpack.c.l.b16 %v1530
    %v1705 = vunpack.c.h.b16 %v1530
    %v1706 = vunpack.c.l.b16 %v1531
    %v1707 = vunpack.c.h.b16 %v1531
    %v1708 = vunpack.c.l.b16 %v1532
    %v1709 = vunpack.c.h.b16 %v1532
    %v1710 = vunpack.c.l.b16 %v1533
    %v1711 = vunpack.c.h.b16 %v1533
    %v1712 = vunpack.c.l.b16 %v1534
    %v1713 = vunpack.c.h.b16 %v1534
    %v1714 = vunpack.c.l.b16 %v1535
    %v1715 = vunpack.c.h.b16 %v1535
    %v1716 = vunpack.c.l.b16 %v1536
    %v1717 = vunpack.c.h.b16 %v1536
    %v1718 = vunpack.c.l.b16 %v1537
    %v1719 = vunpack.c.h.b16 %v1537
    %v1720 = vunpack.c.l.b16 %v1538
    %v1721 = vunpack.c.h.b16 %v1538
    %v1722 = vunpack.c.l.b16 %v1539
    %v1723 = vunpack.c.h.b16 %v1539
    %v1724 = vunpack.c.l.b16 %v1540
    %v1725 = vunpack.c.h.b16 %v1540
    %v1726 = vunpack.c.l.b16 %v1541
    %v1727 = vunpack.c.h.b16 %v1541
    %v1728 = vunpack.c.l.b16 %v1542
    %v1729 = vunpack.c.h.b16 %v1542
    %v1730 = vunpack.c.l.b16 %v1543
    %v1731 = vunpack.c.h.b16 %v1543
    %v1732 = vunpack.c.l.b16 %v1544
    %v1733 = vunpack.c.h.b16 %v1544
    %v1734 = vunpack.c.l.b16 %v1545
    %v1735 = vunpack.c.h.b16 %v1545
    %v1736 = vunpack.c.l.b16 %v1546
    %v1737 = vunpack.c.h.b16 %v1546
    %v1738 = vunpack.c.l.b16 %v1547
    %v1739 = vunpack.c.h.b16 %v1547
    %v1740 = vunpack.c.l.b16 %v1548
    %v1741 = vunpack.c.h.b16 %v1548
    %v1742 = vunpack.c.l.b16 %v1549
    %v1743 = vunpack.c.h.b16 %v1549
    %v1744 = vunpack.c.l.b16 %v1550
    %v1745 = vunpack.c.h.b16 %v1550
    %v1746 = vunpack.c.l.b16 %v1551
    %v1747 = vunpack.c.h.b16 %v1551
    %v1748 = vunpack.c.l.b16 %v1552
    %v1749 = vunpack.c.h.b16 %v1552
    %v1750 = vunpack.c.l.b16 %v1553
    %v1751 = vunpack.c.h.b16 %v1553
    %v1752 = vunpack.c.l.b16 %v1554
    %v1753 = vunpack.c.h.b16 %v1554
    %v1754 = vunpack.c.l.b16 %v1555
    %v1755 = vunpack.c.h.b16 %v1555
    %v1756 = vunpack.c.l.b16 %v1556
    %v1757 = vunpack.c.h.b16 %v1556
    %v1758 = vunpack.c.l.b16 %v1557
    %v1759 = vunpack.c.h.b16 %v1557
    %v1760 = vunpack.c.l.b16 %v1558
    %v1761 = vunpack.c.h.b16 %v1558
    %v1762 = vpack.c.b16 %v1636, %v1634
    %v1763 = vpack.c.b16 %v1637, %v1635
    %v1764 = vpack.c.b16 %v1640, %v1638
    %v1765 = vpack.c.b16 %v1641, %v1639
    %v1766 = vpack.c.b16 %v1644, %v1642
    %v1767 = vpack.c.b16 %v1645, %v1643
    %v1768 = vpack.c.b16 %v1648, %v1646
    %v1769 = vpack.c.b16 %v1649, %v1647
    %v1770 = vpack.c.b16 %v1652, %v1650
    %v1771 = vpack.c.b16 %v1653, %v1651
    %v1772 = vpack.c.b16 %v1656, %v1654
    %v1773 = vpack.c.b16 %v1657, %v1655
    %v1774 = vpack.c.b16 %v1660, %v1658
    %v1775 = vpack.c.b16 %v1661, %v1659
    %v1776 = vpack.c.b16 %v1664, %v1662
    %v1777 = vpack.c.b16 %v1665, %v1663
    %v1778 = vpack.c.b16 %v1668, %v1666
    %v1779 = vpack.c.b16 %v1669, %v1667
    %v1780 = vpack.c.b16 %v1672, %v1670
    %v1781 = vpack.c.b16 %v1673, %v1671
    %v1782 = vpack.c.b16 %v1676, %v1674
    %v1783 = vpack.c.b16 %v1677, %v1675
    %v1784 = vpack.c.b16 %v1680, %v1678
    %v1785 = vpack.c.b16 %v1681, %v1679
    %v1786 = vpack.c.b16 %v1684, %v1682
    %v1787 = vpack.c.b16 %v1685, %v1683
    %v1788 = vpack.c.b16 %v1688, %v1686
    %v1789 = vpack.c.b16 %v1689, %v1687
    %v1790 = vpack.c.b16 %v1692, %v1690
    %v1791 = vpack.c.b16 %v1693, %v1691
    %v1792 = vpack.c.b16 %v1696, %v1694
    %v1793 = vpack.c.b16 %v1697, %v1695
    %v1794 = vpack.c.b16 %v1700, %v1698
    %v1795 = vpack.c.b16 %v1701, %v1699
    %v1796 = vpack.c.b16 %v1704, %v1702
    %v1797 = vpack.c.b16 %v1705, %v1703
    %v1798 = vpack.c.b16 %v1708, %v1706
    %v1799 = vpack.c.b16 %v1709, %v1707
    %v1800 = vpack.c.b16 %v1712, %v1710
    %v1801 = vpack.c.b16 %v1713, %v1711
    %v1802 = vpack.c.b16 %v1716, %v1714
    %v1803 = vpack.c.b16 %v1717, %v1715
    %v1804 = vpack.c.b16 %v1720, %v1718
    %v1805 = vpack.c.b16 %v1721, %v1719
    %v1806 = vpack.c.b16 %v1724, %v1722
    %v1807 = vpack.c.b16 %v1725, %v1723
    %v1808 = vpack.c.b16 %v1728, %v1726
    %v1809 = vpack.c.b16 %v1729, %v1727
    %v1810 = vpack.c.b16 %v1732, %v1730
    %v1811 = vpack.c.b16 %v1733, %v1731
    %v1812 = vpack.c.b16 %v1736, %v1734
    %v1813 = vpack.c.b16 %v1737, %v1735
    %v1814 = vpack.c.b16 %v1740, %v1738
    %v1815 = vpack.c.b16 %v1741, %v1739
    %v1816 = vpack.c.b16 %v1744, %v1742
    %v1817 = vpack.c.b16 %v1745, %v1743
    %v1818 = vpack.c.b16 %v1748, %v1746
    %v1819 = vpack.c.b16 %v1749, %v1747
    %v1820 = vpack.c.b16 %v1752, %v1750
    %v1821 = vpack.c.b16 %v1753, %v1751
    %v1822 = vpack.c.b16 %v1756, %v1754
    %v1823 = vpack.c.b16 %v1757, %v1755
    %v1824 = vpack.c.b16 %v1760, %v1758
    %v1825 = vpack.c.b16 %v1761, %v1759
    %1890 = vmatpush.bf16.msra.mxu0 %v1776
    %1891 = vmatpush.bf16.msra.mxu0 %v1774
    %1892 = vmatpush.bf16.msra.mxu0 %v1772
    %1893 = vmatpush.bf16.msra.mxu0 %v1770
    %1894 = vmatpush.bf16.msra.mxu0 %v1768
    %1895 = vmatpush.bf16.msra.mxu0 %v1766
    %1896 = vmatpush.bf16.msra.mxu0 %v1764
    %1897 = vmatpush.bf16.msra.mxu0 %v1762
    %1898 = vmatmul.bf16.gmra.mxu0 %v1561
    %v1899 = vpop.f32.mrf.mxu0
    %v1900 = vadd.f32 %v1566, %v1899
    %v1901 = vpop.f32.mrf.mxu0
    %1902 = vdwg.mxu0
    %1903 = vmatpush.bf16.msra.mxu0 %v1792
    %1904 = vmatpush.bf16.msra.mxu0 %v1790
    %1905 = vmatpush.bf16.msra.mxu0 %v1788
    %1906 = vmatpush.bf16.msra.mxu0 %v1786
    %1907 = vmatpush.bf16.msra.mxu0 %v1784
    %1908 = vmatpush.bf16.msra.mxu0 %v1782
    %1909 = vmatpush.bf16.msra.mxu0 %v1780
    %1910 = vmatpush.bf16.msra.mxu0 %v1778
    %1911 = vmatmul.bf16.gmra.mxu0 %v1562
    %v1912 = vpop.f32.mrf.mxu0
    %v1913 = vadd.f32 %v1900, %v1912
    %v1914 = vpop.f32.mrf.mxu0
    %1915 = vdwg.mxu0
    %1916 = vmatpush.bf16.msra.mxu0 %v1808
    %1917 = vmatpush.bf16.msra.mxu0 %v1806
    %1918 = vmatpush.bf16.msra.mxu0 %v1804
    %1919 = vmatpush.bf16.msra.mxu0 %v1802
    %1920 = vmatpush.bf16.msra.mxu0 %v1800
    %1921 = vmatpush.bf16.msra.mxu0 %v1798
    %1922 = vmatpush.bf16.msra.mxu0 %v1796
    %1923 = vmatpush.bf16.msra.mxu0 %v1794
    %1924 = vmatmul.bf16.gmra.mxu0 %v1563
    %v1925 = vpop.f32.mrf.mxu0
    %v1926 = vadd.f32 %v1913, %v1925
    %v1927 = vpop.f32.mrf.mxu0
    %1928 = vdwg.mxu0
    %1929 = vmatpush.bf16.msra.mxu0 %v1824
    %1930 = vmatpush.bf16.msra.mxu0 %v1822
    %1931 = vmatpush.bf16.msra.mxu0 %v1820
    %1932 = vmatpush.bf16.msra.mxu0 %v1818
    %1933 = vmatpush.bf16.msra.mxu0 %v1816
    %1934 = vmatpush.bf16.msra.mxu0 %v1814
    %1935 = vmatpush.bf16.msra.mxu0 %v1812
    %1936 = vmatpush.bf16.msra.mxu0 %v1810
    %1937 = vmatmul.bf16.gmra.mxu0 %v1564
    %v1938 = vpop.f32.mrf.mxu0
    %v1939 = vadd.f32 %v1926, %v1938
    %v1940 = vpop.f32.mrf.mxu0
    %1941 = vdwg.mxu0
    %1942 = vmatpush.bf16.msra.mxu0 %v1777
    %1943 = vmatpush.bf16.msra.mxu0 %v1775
    %1944 = vmatpush.bf16.msra.mxu0 %v1773
    %1945 = vmatpush.bf16.msra.mxu0 %v1771
    %1946 = vmatpush.bf16.msra.mxu0 %v1769
    %1947 = vmatpush.bf16.msra.mxu0 %v1767
    %1948 = vmatpush.bf16.msra.mxu0 %v1765
    %1949 = vmatpush.bf16.msra.mxu0 %v1763
    %1950 = vmatmul.bf16.gmra.mxu0 %v1561
    %v1951 = vpop.f32.mrf.mxu0
    %v1952 = vadd.f32 %v1567, %v1951
    %v1953 = vpop.f32.mrf.mxu0
    %1954 = vdwg.mxu0
    %1955 = vmatpush.bf16.msra.mxu0 %v1793
    %1956 = vmatpush.bf16.msra.mxu0 %v1791
    %1957 = vmatpush.bf16.msra.mxu0 %v1789
    %1958 = vmatpush.bf16.msra.mxu0 %v1787
    %1959 = vmatpush.bf16.msra.mxu0 %v1785
    %1960 = vmatpush.bf16.msra.mxu0 %v1783
    %1961 = vmatpush.bf16.msra.mxu0 %v1781
    %1962 = vmatpush.bf16.msra.mxu0 %v1779
    %1963 = vmatmul.bf16.gmra.mxu0 %v1562
    %v1964 = vpop.f32.mrf.mxu0
    %v1965 = vadd.f32 %v1952, %v1964
    %v1966 = vpop.f32.mrf.mxu0
    %1967 = vdwg.mxu0
    %1968 = vmatpush.bf16.msra.mxu0 %v1809
    %1969 = vmatpush.bf16.msra.mxu0 %v1807
    %1970 = vmatpush.bf16.msra.mxu0 %v1805
    %1971 = vmatpush.bf16.msra.mxu0 %v1803
    %1972 = vmatpush.bf16.msra.mxu0 %v1801
    %1973 = vmatpush.bf16.msra.mxu0 %v1799
    %1974 = vmatpush.bf16.msra.mxu0 %v1797
    %1975 = vmatpush.bf16.msra.mxu0 %v1795
    %1976 = vmatmul.bf16.gmra.mxu0 %v1563
    %v1977 = vpop.f32.mrf.mxu0
    %v1978 = vadd.f32 %v1965, %v1977
    %v1979 = vpop.f32.mrf.mxu0
    %1980 = vdwg.mxu0
    %1981 = vmatpush.bf16.msra.mxu0 %v1825
    %1982 = vmatpush.bf16.msra.mxu0 %v1823
    %1983 = vmatpush.bf16.msra.mxu0 %v1821
    %1984 = vmatpush.bf16.msra.mxu0 %v1819
    %1985 = vmatpush.bf16.msra.mxu0 %v1817
    %1986 = vmatpush.bf16.msra.mxu0 %v1815
    %1987 = vmatpush.bf16.msra.mxu0 %v1813
    %1988 = vmatpush.bf16.msra.mxu0 %v1811
    %1989 = vmatmul.bf16.gmra.mxu0 %v1564
    %v1990 = vpop.f32.mrf.mxu0
    %v1991 = vadd.f32 %v1978, %v1990
    %v1992 = vpop.f32.mrf.mxu0
    %1993 = vdwg.mxu0
    %v1994 = vxor.u32 %v1939, 2147483648
    %v1995 = vxor.u32 %v1991, 2147483648
    %v1996 = vmul.f32 %v1994, 1.442695
    %v1997 = vpow.pop %v1996
    %v1998 = vmul.f32 %v1995, 1.442695
    %v1999 = vpow.pop %v1998
    %v2000 = vadd.f32 %v1997, 1.0
    %v2001 = vadd.f32 %v1999, 1.0
    %v2002 = vrcp.pop %v2000
    %v2003 = vmul.f32 %v2000, %v2002
    %v2004 = vsub.f32 1.0, %v2003
    %v2005 = vmul.f32 %v2002, %v2004
    %v2006 = vadd.f32 %v2002, %v2005
    %vm2007 = vweird.f32 %v2000
    %vm2008 = vweird.f32 %v2002
    %vm2009 = vmor %vm2007, %vm2008
    %v2010 = vsel %vm2009, %v2002, %v2006
    %v2011 = vand.u32 2147483647, %v2000
    %vm2012 = vcmp.eq.f32.partialorder %v2011, 8.507059e+37
    %v2013 = vand.u32 %v2000, 2147483648
    %v2014 = vor.u32 1.1754944e-38, %v2013
    %v2015 = vsel %vm2012, %v2014, %v2010
    %v2016 = vmul.f32 1.0, %v2015
    %v2017 = vrcp.pop %v2001
    %v2018 = vmul.f32 %v2001, %v2017
    %v2019 = vsub.f32 1.0, %v2018
    %v2020 = vmul.f32 %v2017, %v2019
    %v2021 = vadd.f32 %v2017, %v2020
    %vm2022 = vweird.f32 %v2001
    %vm2023 = vweird.f32 %v2017
    %vm2024 = vmor %vm2022, %vm2023
    %v2025 = vsel %vm2024, %v2017, %v2021
    %v2026 = vand.u32 2147483647, %v2001
    %vm2027 = vcmp.eq.f32.partialorder %v2026, 8.507059e+37
    %v2028 = vand.u32 %v2001, 2147483648
    %v2029 = vor.u32 1.1754944e-38, %v2028
    %v2030 = vsel %vm2027, %v2029, %v2025
    %v2031 = vmul.f32 1.0, %v2030
    %2032 = vst [vmem:[#allocation11] sm:$0xff] %v2016
    %2033 = vst [vmem:[#allocation11 + $0x8] sm:$0xff] %v2031
    // Predicated region
    $region42: #{tpu_custom_call.1} parent=1 // pred_check
      _
    $region43: #{tpu_custom_call.1} parent=1 // pred_check_branch
      %2035 = sbr.rel (0) target = $region45
    $region44: #{tpu_custom_call.1} parent=1 // pred_region
      %2037 = vsyncadd [#allocation4], 0
      %s2039 = sshll.u32 [#allocation11], 4
      %s2040 = int_to_ptr.vmem [resolvable:$true] %s2039
      %s2041 = sshll.u32 %s5, 4
      %s2042 = int_to_ptr.hbm [resolvable:$true] %s2041
      %2044 = dma.vmem_to_hbm [thread:$0]  %s2040, 256, %s2042, [#allocation4]
    $region45: #{tpu_custom_call.1} parent=1 // pred_fallthru
      _
    // Predicated region
    $region46: #{tpu_custom_call.1} parent=1 // pred_check
      _
    $region47: #{tpu_custom_call.1} parent=1 // pred_check_branch
      %2046 = sbr.rel (0) target = $region49
    $region48: #{tpu_custom_call.1} parent=1 // pred_region
      %2048 = dma.done [#allocation4], 256
    $region49: #{tpu_custom_call.1} parent=1 // pred_fallthru
      _
    %2049 = vsyncpa [#allocation3], 1
    %2050 = vsyncpa [#allocation6], 1
    %2051 = vsyncpa [#allocation9], 1
    %2052 = vsyncpa [#allocation4], 1

</llo_original>
